<compile_context>
chip_gen: v5e
topology: v5e:2x2
jax: 0.10.0
libtpu: 0.0.40
codegen_flags: <defaults>
</compile_context>

<pallas_src>
import functools

import jax
import jax.numpy as jnp
from jax import lax
from jax.experimental import pallas as pl
from jax.experimental.pallas import tpu as pltpu


# ---------------------------------------------------------------------------
# Tiling helpers
# ---------------------------------------------------------------------------
def _pick_tile(n, cap, align):
    """Largest divisor of n that is <= cap and a multiple of `align`, else n."""
    for d in range(min(cap, n), 0, -1):
        if n % d == 0 and d % align == 0:
            return d
    return n


def _pick_g_blk(num_graphs, n_per_graph, max_rows=512):
    for cand in range(num_graphs, 0, -1):
        rows = cand * n_per_graph
        if (num_graphs % cand == 0 and rows <= max_rows
                and (rows % 8 == 0 or cand == num_graphs)):
            return cand
    return num_graphs


def _plan_gcn_tiles(n, fin, fout, a_itemsize, x_itemsize, out_itemsize,
                    tm=None, tk=None, x_resident=None, a_buffers=2,
                    vmem_budget_bytes=40 << 20):
    """Pick (tm, tk, x_resident, vmem_limit) under a v7x-safe VMEM budget."""
    if tm is None:
        tm = _pick_tile(n, 512, 16)        # 16-sublane align: bf16 A min tile
    if tk is None:
        tk = _pick_tile(n, 2048, 128)
    if x_resident is None:
        # Keep the full (N, F_in) second operand resident when it is small.
        x_resident = n * fin * x_itemsize <= (8 << 20)

    def est(tm_, tk_, res_):
        a_b = a_buffers * tm_ * tk_ * a_itemsize
        x_b = (n * fin * x_itemsize) if res_ else (2 * tk_ * fin * x_itemsize)
        w_b = fin * fout * 4 + 128 * 4
        o_b = 2 * tm_ * fout * out_itemsize
        acc = tm_ * fin * 4
        return a_b + x_b + w_b + o_b + acc

    # Shrink until the plan fits the budget (re-derived for v7x 64 MiB/TC).
    while est(tm, tk, x_resident) > vmem_budget_bytes:
        if x_resident and n * fin * x_itemsize > (2 << 20):
            x_resident = False
            continue
        new_tk = _pick_tile(n, max(tk // 2, 128), 128)
        if new_tk < tk:
            tk = new_tk
            continue
        new_tm = _pick_tile(n, max(tm // 2, 16), 16)
        if new_tm < tm:
            tm = new_tm
            continue
        break

    # Raise the scoped VMEM limit above the v5e (16 MiB) / v6e (32 MiB)
    # defaults but stay well inside v7x's 64 MiB physical VMEM.
    vmem_limit = int(min(max(2 * est(tm, tk, x_resident), 32 << 20), 48 << 20))
    return tm, tk, x_resident, vmem_limit


# ---------------------------------------------------------------------------
# Kernel 1: one GCN layer   out = relu((A_hat @ X) @ W + b)
#   grid = (N//TM rows "parallel", N//TK K-steps "arbitrary"); f32 VMEM
#   accumulator; A (and X) fed to the MXU in native bf16; W applied + ReLU at
#   the last K step.  X is either VMEM-resident (sliced per K step) or a
#   streamed (TK, F_in) slab.
# ---------------------------------------------------------------------------
def _gcn_layer_kernel(a_ref, x_ref, w_ref, b_ref, o_ref, acc_ref, *,
                      tk, x_resident):
    k = pl.program_id(1)

    @pl.when(k == 0)
    def _():
        acc_ref[...] = jnp.zeros_like(acc_ref)

    if x_resident:
        start = k * tk
        if tk % 128 == 0:
            start = pl.multiple_of(start, 128)
        x = x_ref[pl.ds(start, tk), :]
    else:
        x = x_ref[...]
    # Single clean dot->accumulate chain (no VPU upcasts in between); bf16 x
    # bf16 on the MXU with f32 accumulation.
    acc_ref[...] += jnp.dot(a_ref[...], x, preferred_element_type=jnp.float32)

    @pl.when(k == pl.num_programs(1) - 1)
    def _():
        y = jnp.dot(acc_ref[...], w_ref[...],
                    preferred_element_type=jnp.float32) + b_ref[...]
        o_ref[...] = jnp.maximum(y, 0.0).astype(o_ref.dtype)


def gcn_layer(a_hat, x, w, b, *, out_dtype=jnp.float32, tm=None, tk=None,
              x_resident=None, a_buffers=2):
    n, fin = x.shape
    fout = w.shape[1]
    tm, tk, x_resident, vmem_limit = _plan_gcn_tiles(
        n, fin, fout,
        a_itemsize=jnp.dtype(a_hat.dtype).itemsize,
        x_itemsize=jnp.dtype(x.dtype).itemsize,
        out_itemsize=jnp.dtype(out_dtype).itemsize,
        tm=tm, tk=tk, x_resident=x_resident, a_buffers=a_buffers)
    assert n % tm == 0 and n % tk == 0
    assert tm % 16 == 0 or tm == n       # bf16 A sublane tile is (16, 128)
    assert tk % 128 == 0 or tk == n

    # Optional deeper A pipeline for v7x (hides DMA jitter at 3.2 TB/s HBM).
    a_kwargs = {"pipeline_mode": pl.Buffered(a_buffers)} if a_buffers != 2 else {}
    a_spec = pl.BlockSpec((tm, tk), lambda i, k: (i, k), **a_kwargs)
    if x_resident:
        # Constant block index => fetched once, resident across the whole grid;
        # removes the per-row-tile re-fetch of the K-slab.
        x_spec = pl.BlockSpec((n, fin), lambda i, k: (0, 0))
    else:
        x_spec = pl.BlockSpec((tk, fin), lambda i, k: (k, 0))

    kernel = functools.partial(_gcn_layer_kernel, tk=tk, x_resident=x_resident)
    grid = (n // tm, n // tk)
    return pl.pallas_call(
        kernel,
        out_shape=jax.ShapeDtypeStruct((n, fout), out_dtype),
        grid_spec=pltpu.PrefetchScalarGridSpec(
            num_scalar_prefetch=0,
            grid=grid,
            in_specs=[
                a_spec,                                           # A tile
                x_spec,                                           # X (resident or slab)
                pl.BlockSpec((fin, fout), lambda i, k: (0, 0)),   # W (resident)
                pl.BlockSpec((1, fout), lambda i, k: (0, 0)),     # bias row
            ],
            out_specs=pl.BlockSpec((tm, fout), lambda i, k: (i, 0)),
            scratch_shapes=[pltpu.VMEM((tm, fin), jnp.float32)],
        ),
        compiler_params=pltpu.CompilerParams(
            dimension_semantics=("parallel", "arbitrary"),
            vmem_limit_bytes=vmem_limit),
    )(a_hat, x, w, b.reshape(1, -1))


# ---------------------------------------------------------------------------
# Kernel 2: SOPOOL over a block of graphs per grid step.
#   L2-normalize rows (EUP rsqrt) -> 3 shared Linear+ReLU as one 2-D matmul
#   over all nodes of the block -> per-graph second-order pooling G^T G via
#   dot_general contracting the node axis (no explicit transpose).
# ---------------------------------------------------------------------------
def _sopool_kernel(h_ref, w1, b1, w2, b2, w3, b3, o_ref, *, g_blk, n_per_graph):
    h = h_ref[...]                                            # (g_blk*n_g, 128)
    # F.normalize(dim=1): x / max(||x||, 1e-12)  ==  x * rsqrt(max(||x||^2, 1e-24))
    sumsq = jnp.sum(h * h, axis=1, keepdims=True)
    hn = h * lax.rsqrt(jnp.maximum(sumsq, 1e-24))             # EUP slot, not VALU div
    g = jnp.maximum(
        jnp.dot(hn, w1[...], preferred_element_type=jnp.float32) + b1[...], 0.0)
    g = jnp.maximum(
        jnp.dot(g, w2[...], preferred_element_type=jnp.float32) + b2[...], 0.0)
    g = jnp.maximum(
        jnp.dot(g, w3[...], preferred_element_type=jnp.float32) + b3[...], 0.0)

    dn = (((0,), (0,)), ((), ()))    # contract node axis of both operands
    for bb in range(g_blk):          # static unroll, g_blk is small
        gb = g[bb * n_per_graph:(bb + 1) * n_per_graph, :]     # (n_g, 32)
        o_ref[bb, :, :] = lax.dot_general(
            gb, gb, dn, preferred_element_type=jnp.float32)    # (32, 32)


def sopool_gram(h2, n_per_graph, num_graphs, w1, b1, w2, b2, w3, b3, *,
                g_blk=None):
    d_in = h2.shape[1]
    d1 = w1.shape[1]
    d2 = w3.shape[1]
    if g_blk is None:
        g_blk = _pick_g_blk(num_graphs, n_per_graph)
    rows = g_blk * n_per_graph
    assert num_graphs % g_blk == 0
    assert rows % 8 == 0 or g_blk == num_graphs

    kernel = functools.partial(_sopool_kernel, g_blk=g_blk,
                               n_per_graph=n_per_graph)
    return pl.pallas_call(
        kernel,
        out_shape=jax.ShapeDtypeStruct((num_graphs, d2, d2), jnp.float32),
        grid=(num_graphs // g_blk,),
        in_specs=[
            pl.BlockSpec((rows, d_in), lambda b: (b, 0)),
            pl.BlockSpec((d_in, d1), lambda b: (0, 0)),
            pl.BlockSpec((1, d1), lambda b: (0, 0)),
            pl.BlockSpec((d1, d1), lambda b: (0, 0)),
            pl.BlockSpec((1, d1), lambda b: (0, 0)),
            pl.BlockSpec((d1, d2), lambda b: (0, 0)),
            pl.BlockSpec((1, d2), lambda b: (0, 0)),
        ],
        out_specs=pl.BlockSpec((g_blk, d2, d2), lambda b: (b, 0, 0)),
        compiler_params=pltpu.CompilerParams(
            dimension_semantics=("parallel",)),
    )(h2, w1, b1.reshape(1, -1), w2, b2.reshape(1, -1), w3, b3.reshape(1, -1))


# ---------------------------------------------------------------------------
# Kernel 3: MLP_1 head  (1024 -> 32 -> 32 -> 2), ReLU after every layer.
#   Last layer is lane-padded to 128 outputs (unmasked vst); sliced outside.
# ---------------------------------------------------------------------------
def _mlp_kernel(x_ref, w1, b1, w2, b2, w3, b3, o_ref):
    h = jnp.maximum(
        jnp.dot(x_ref[...], w1[...], preferred_element_type=jnp.float32)
        + b1[...], 0.0)
    h = jnp.maximum(
        jnp.dot(h, w2[...], preferred_element_type=jnp.float32) + b2[...], 0.0)
    o_ref[...] = jnp.maximum(
        jnp.dot(h, w3[...], preferred_element_type=jnp.float32) + b3[...], 0.0)


def mlp_head(x, w1, b1, w2, b2, w3_padded, b3_padded):
    bsz, din = x.shape
    dh = w1.shape[1]
    dpad = w3_padded.shape[1]
    return pl.pallas_call(
        _mlp_kernel,
        out_shape=jax.ShapeDtypeStruct((bsz, dpad), jnp.float32),
        grid=(1,),
        in_specs=[
            pl.BlockSpec((bsz, din), lambda i: (0, 0)),
            pl.BlockSpec((din, dh), lambda i: (0, 0)),
            pl.BlockSpec((1, dh), lambda i: (0, 0)),
            pl.BlockSpec((dh, dh), lambda i: (0, 0)),
            pl.BlockSpec((1, dh), lambda i: (0, 0)),
            pl.BlockSpec((dh, dpad), lambda i: (0, 0)),
            pl.BlockSpec((1, dpad), lambda i: (0, 0)),
        ],
        out_specs=pl.BlockSpec((bsz, dpad), lambda i: (0, 0)),
    )(x, w1, b1.reshape(1, -1), w2, b2.reshape(1, -1),
      w3_padded, b3_padded.reshape(1, -1))


# ---------------------------------------------------------------------------
# Glue: GCN symmetric-normalized dense adjacency
#       (scatter edges, add remaining self loops, D^-1/2 A D^-1/2)
# ---------------------------------------------------------------------------
def build_norm_adj(edge_index, edge_weight, num_nodes):
    src, dst = edge_index[0], edge_index[1]
    a = jnp.zeros((num_nodes, num_nodes), jnp.float32)
    a = a.at[dst, src].add(edge_weight)          # A_hat[target, source]
    diag = jnp.diagonal(a)
    a = a + jnp.diag(jnp.where(diag == 0.0, 1.0, 0.0))
    deg = jnp.sum(a, axis=1)
    dinv = jnp.where(deg > 0.0, 1.0 / jnp.sqrt(deg), 0.0)
    return dinv[:, None] * a * dinv[None, :]


def prepare_params(params, lane=128):
    """Precompute the lane-padded last MLP layer once (no per-call jnp.pad)."""
    dout = params["mlp_w3"].shape[1]
    pad = lane - dout
    out = dict(params)
    out["mlp_w3p"] = jnp.pad(params["mlp_w3"], ((0, 0), (0, pad)))
    out["mlp_b3p"] = jnp.pad(params["mlp_b3"], (0, pad))
    return out


# ---------------------------------------------------------------------------
# Full forward pass (eval mode)
# ---------------------------------------------------------------------------
@functools.partial(
    jax.jit,
    static_argnames=("n_per_graph", "num_graphs", "use_bf16_adj",
                     "sopool_g_blk", "gcn_tm", "gcn_tk", "gcn_a_buffers"))
def gnn_forward(x, a_hat, params, n_per_graph, num_graphs,
                use_bf16_adj=True, sopool_g_blk=None,
                gcn_tm=None, gcn_tk=None, gcn_a_buffers=2):
    if use_bf16_adj:
        # bf16 A + bf16 X/h1 fed straight to the MXU; f32 accumulation in-kernel.
        a_cast = a_hat.astype(jnp.bfloat16)
        x_in = x.astype(jnp.bfloat16)
        h1_dtype = jnp.bfloat16          # bf16 intermediate: halves h1 traffic
    else:
        a_cast, x_in, h1_dtype = a_hat, x, jnp.float32

    h1 = gcn_layer(a_cast, x_in, params["gcn1_w"], params["gcn1_b"],
                   out_dtype=h1_dtype, tm=gcn_tm, tk=gcn_tk,
                   a_buffers=gcn_a_buffers)
    h2 = gcn_layer(a_cast, h1, params["gcn2_w"], params["gcn2_b"],
                   out_dtype=jnp.float32, tm=gcn_tm, tk=gcn_tk,
                   a_buffers=gcn_a_buffers)
    # dropout(p=0.5) is identity in eval mode

    gram = sopool_gram(h2, n_per_graph, num_graphs,
                       params["sop_w1"], params["sop_b1"],
                       params["sop_w2"], params["sop_b2"],
                       params["sop_w3"], params["sop_b3"],
                       g_blk=sopool_g_blk)
    hh_tensor = gram.reshape(num_graphs, -1)     # (B, 32*32) row-major flatten

    dout = params["mlp_w3"].shape[1]
    if "mlp_w3p" in params:                       # precomputed in prepare_params
        w3p, b3p = params["mlp_w3p"], params["mlp_b3p"]
    else:                                         # fallback (per-call pad)
        pad = 128 - dout
        w3p = jnp.pad(params["mlp_w3"], ((0, 0), (0, pad)))
        b3p = jnp.pad(params["mlp_b3"], (0, pad))
    out_padded = mlp_head(hh_tensor,
                          params["mlp_w1"], params["mlp_b1"],
                          params["mlp_w2"], params["mlp_b2"],
                          w3p, b3p)
    out = out_padded[:, :dout]                    # relu(0)=0 keeps padding at 0
    # trailing dropout(p=0.5) also identity in eval mode
    return hh_tensor, out


# ---------------------------------------------------------------------------
# Pure-JAX reference (mirrors the PyTorch module, eval mode) for validation.
# ---------------------------------------------------------------------------
def reference_forward(x, a_hat, params, n_per_graph, num_graphs):
    h1 = jax.nn.relu(a_hat @ (x @ params["gcn1_w"]) + params["gcn1_b"])
    h2 = jax.nn.relu(a_hat @ (h1 @ params["gcn2_w"]) + params["gcn2_b"])
    norm = jnp.sqrt(jnp.sum(h2 * h2, axis=1, keepdims=True))
    hn = h2 / jnp.maximum(norm, 1e-12)
    g = jax.nn.relu(hn @ params["sop_w1"] + params["sop_b1"])
    g = jax.nn.relu(g @ params["sop_w2"] + params["sop_b2"])
    g = jax.nn.relu(g @ params["sop_w3"] + params["sop_b3"])
    g = g.reshape(num_graphs, n_per_graph, -1)
    gram = jnp.einsum("bnd,bne->bde", g, g)
    hh = gram.reshape(num_graphs, -1)
    o = jax.nn.relu(hh @ params["mlp_w1"] + params["mlp_b1"])
    o = jax.nn.relu(o @ params["mlp_w2"] + params["mlp_b2"])
    o = jax.nn.relu(o @ params["mlp_w3"] + params["mlp_b3"])
    return hh, o


def init_params(key, num_features):
    dims = {
        "gcn1_w": (num_features, 128), "gcn1_b": (128,),
        "gcn2_w": (128, 128),          "gcn2_b": (128,),
        "sop_w1": (128, 32), "sop_b1": (32,),
        "sop_w2": (32, 32),  "sop_b2": (32,),
        "sop_w3": (32, 32),  "sop_b3": (32,),
        "mlp_w1": (32 * 32, 32), "mlp_b1": (32,),
        "mlp_w2": (32, 32),      "mlp_b2": (32,),
        "mlp_w3": (32, 2),       "mlp_b3": (2,),
    }
    params = {}
    keys = jax.random.split(key, len(dims))
    for (name, shape), k in zip(dims.items(), keys):
        fan_in = shape[0]
        scale = 1.0 / jnp.sqrt(jnp.float32(max(fan_in, 1)))
        params[name] = scale * jax.random.normal(k, shape, dtype=jnp.float32)
    return params


if __name__ == "__main__":
    key = jax.random.PRNGKey(0)
    k_x, k_p = jax.random.split(key)

    num_features = 16
    num_graphs = 4
    n_per_graph = 8
    num_nodes = num_graphs * n_per_graph

    # bidirectional ring within each graph
    src, dst = [], []
    for g in range(num_graphs):
        base = g * n_per_graph
        for i in range(n_per_graph):
            j = (i + 1) % n_per_graph
            src += [base + i, base + j]
            dst += [base + j, base + i]
    edge_index = jnp.array([src, dst], dtype=jnp.int32)
    edge_attr = jnp.ones((edge_index.shape[1],), dtype=jnp.float32)

    x = jax.random.normal(k_x, (num_nodes, num_features), dtype=jnp.float32)
    params = prepare_params(init_params(k_p, num_features))
    a_hat = build_norm_adj(edge_index, edge_attr, num_nodes)

    ref_hh, ref_out = reference_forward(x, a_hat, params, n_per_graph, num_graphs)

    # Exact-precision path (f32 adjacency) validates kernel semantics.
    # gcn_tm=16 / sopool_g_blk=2 exercise the multi-block row grid and the
    # multi-step graph-block grid even at this tiny demo size.
    hh32, out32 = gnn_forward(x, a_hat, params, n_per_graph, num_graphs,
                              use_bf16_adj=False, sopool_g_blk=2, gcn_tm=16)
    jax.block_until_ready((hh32, out32))
    assert hh32.shape == (num_graphs, 32 * 32)
    assert out32.shape == (num_graphs, 2)
    assert bool(jnp.allclose(hh32, ref_hh, rtol=1e-2, atol=1e-3)), "f32 HH mismatch"
    assert bool(jnp.allclose(out32, ref_out, rtol=1e-2, atol=1e-3)), "f32 out mismatch"

    # Default fast path: bf16 adjacency + bf16 intermediates (f32 accumulation).
    hh_tensor, output = gnn_forward(x, a_hat, params, n_per_graph, num_graphs,
                                    use_bf16_adj=True, sopool_g_blk=2,
                                    gcn_tm=16)
    jax.block_until_ready((hh_tensor, output))

    assert hh_tensor.shape == (num_graphs, 32 * 32)
    assert output.shape == (num_graphs, 2)
    assert bool(jnp.all(jnp.isfinite(hh_tensor)))
    assert bool(jnp.all(jnp.isfinite(output)))
    # Documented bf16 drift vs the f32 reference (loose, structural check).
    assert bool(jnp.allclose(hh_tensor, ref_hh, rtol=0.2, atol=0.05)), "bf16 HH drift"
    assert bool(jnp.allclose(output, ref_out, rtol=0.2, atol=0.05)), "bf16 out drift"
    print("KERNEL_OK")
</pallas_src>

<mosaic_0001>
module attributes {stable_mosaic.version = 11 : i64} {
  func.func @_sopool_kernel(%arg0: i32, %arg1: memref<16x128xf32, #tpu.memory_space<vmem>>, %arg2: memref<128x32xf32, #tpu.memory_space<vmem>>, %arg3: memref<1x32xf32, #tpu.memory_space<vmem>>, %arg4: memref<32x32xf32, #tpu.memory_space<vmem>>, %arg5: memref<1x32xf32, #tpu.memory_space<vmem>>, %arg6: memref<32x32xf32, #tpu.memory_space<vmem>>, %arg7: memref<1x32xf32, #tpu.memory_space<vmem>>, %arg8: memref<2x32x32xf32, #tpu.memory_space<vmem>>) attributes {dimension_semantics = [#tpu.dimension_semantics<parallel>], iteration_bounds = array<i64: 2>, scalar_prefetch = 0 : i64, scratch_operands = 0 : i64, tpu.core_type = #tpu.core_type<tc>, window_params = [{transform_indices = @transform_0, window_bounds = array<i64: 16, 128>}, {pipeline_mode = #tpu.pipeline_mode<synchronous>, transform_indices = @transform_1, window_bounds = array<i64: 128, 32>}, {pipeline_mode = #tpu.pipeline_mode<synchronous>, transform_indices = @transform_2, window_bounds = array<i64: 1, 32>}, {pipeline_mode = #tpu.pipeline_mode<synchronous>, transform_indices = @transform_3, window_bounds = array<i64: 32, 32>}, {pipeline_mode = #tpu.pipeline_mode<synchronous>, transform_indices = @transform_4, window_bounds = array<i64: 1, 32>}, {pipeline_mode = #tpu.pipeline_mode<synchronous>, transform_indices = @transform_5, window_bounds = array<i64: 32, 32>}, {pipeline_mode = #tpu.pipeline_mode<synchronous>, transform_indices = @transform_6, window_bounds = array<i64: 1, 32>}, {transform_indices = @transform_7, window_bounds = array<i64: 2, 32, 32>}]} {
    %c0 = arith.constant 0 : index
    %c0_0 = arith.constant 0 : index
    %0 = vector.load %arg1[%c0, %c0_0] : memref<16x128xf32, #tpu.memory_space<vmem>>, vector<16x128xf32>
    %1 = arith.mulf %0, %0 : vector<16x128xf32>
    %cst = arith.constant dense<0.000000e+00> : vector<16xf32>
    %2 = vector.multi_reduction <add>, %1, %cst [1] : vector<16x128xf32> to vector<16xf32>
    %3 = vector.shape_cast %2 : vector<16xf32> to vector<16x1xf32>
    %cst_1 = arith.constant 1.000000e-24 : f32
    %4 = vector.broadcast %cst_1 : f32 to vector<16x1xf32>
    %5 = arith.maximumf %3, %4 : vector<16x1xf32>
    %6 = math.rsqrt %5 : vector<16x1xf32>
    %7 = vector.broadcast %6 : vector<16x1xf32> to vector<16x128xf32>
    %8 = arith.mulf %0, %7 : vector<16x128xf32>
    %c0_2 = arith.constant 0 : index
    %c0_3 = arith.constant 0 : index
    %9 = vector.load %arg2[%c0_2, %c0_3] : memref<128x32xf32, #tpu.memory_space<vmem>>, vector<128x32xf32>
    %cst_4 = arith.constant dense<0.000000e+00> : vector<16x32xf32>
    %10 = tpu.matmul %8, %9, %cst_4 {dimension_numbers = #tpu.dot_dimension_numbers<[1], [0], [0], [1], [0, 0, 1, 1], [], []>} : vector<16x128xf32>, vector<128x32xf32>, vector<16x32xf32> -> vector<16x32xf32>
    %c0_5 = arith.constant 0 : index
    %c0_6 = arith.constant 0 : index
    %11 = vector.load %arg3[%c0_5, %c0_6] : memref<1x32xf32, #tpu.memory_space<vmem>>, vector<1x32xf32>
    %12 = vector.broadcast %11 : vector<1x32xf32> to vector<16x32xf32>
    %13 = arith.addf %10, %12 : vector<16x32xf32>
    %cst_7 = arith.constant 0.000000e+00 : f32
    %14 = vector.broadcast %cst_7 : f32 to vector<16x32xf32>
    %15 = arith.maximumf %13, %14 : vector<16x32xf32>
    %c0_8 = arith.constant 0 : index
    %c0_9 = arith.constant 0 : index
    %16 = vector.load %arg4[%c0_8, %c0_9] : memref<32x32xf32, #tpu.memory_space<vmem>>, vector<32x32xf32>
    %cst_10 = arith.constant dense<0.000000e+00> : vector<16x32xf32>
    %17 = tpu.matmul %15, %16, %cst_10 {dimension_numbers = #tpu.dot_dimension_numbers<[1], [0], [0], [1], [0, 0, 1, 1], [], []>} : vector<16x32xf32>, vector<32x32xf32>, vector<16x32xf32> -> vector<16x32xf32>
    %c0_11 = arith.constant 0 : index
    %c0_12 = arith.constant 0 : index
    %18 = vector.load %arg5[%c0_11, %c0_12] : memref<1x32xf32, #tpu.memory_space<vmem>>, vector<1x32xf32>
    %19 = vector.broadcast %18 : vector<1x32xf32> to vector<16x32xf32>
    %20 = arith.addf %17, %19 : vector<16x32xf32>
    %cst_13 = arith.constant 0.000000e+00 : f32
    %21 = vector.broadcast %cst_13 : f32 to vector<16x32xf32>
    %22 = arith.maximumf %20, %21 : vector<16x32xf32>
    %c0_14 = arith.constant 0 : index
    %c0_15 = arith.constant 0 : index
    %23 = vector.load %arg6[%c0_14, %c0_15] : memref<32x32xf32, #tpu.memory_space<vmem>>, vector<32x32xf32>
    %cst_16 = arith.constant dense<0.000000e+00> : vector<16x32xf32>
    %24 = tpu.matmul %22, %23, %cst_16 {dimension_numbers = #tpu.dot_dimension_numbers<[1], [0], [0], [1], [0, 0, 1, 1], [], []>} : vector<16x32xf32>, vector<32x32xf32>, vector<16x32xf32> -> vector<16x32xf32>
    %c0_17 = arith.constant 0 : index
    %c0_18 = arith.constant 0 : index
    %25 = vector.load %arg7[%c0_17, %c0_18] : memref<1x32xf32, #tpu.memory_space<vmem>>, vector<1x32xf32>
    %26 = vector.broadcast %25 : vector<1x32xf32> to vector<16x32xf32>
    %27 = arith.addf %24, %26 : vector<16x32xf32>
    %cst_19 = arith.constant 0.000000e+00 : f32
    %28 = vector.broadcast %cst_19 : f32 to vector<16x32xf32>
    %29 = arith.maximumf %27, %28 : vector<16x32xf32>
    %30 = vector.extract_strided_slice %29 {offsets = [0, 0], sizes = [8, 32], strides = [1, 1]} : vector<16x32xf32> to vector<8x32xf32>
    %cst_20 = arith.constant dense<0.000000e+00> : vector<32x32xf32>
    %31 = tpu.matmul %30, %30, %cst_20 {dimension_numbers = #tpu.dot_dimension_numbers<[0], [0], [1], [1], [0, 1, 1, 1], [], []>} : vector<8x32xf32>, vector<8x32xf32>, vector<32x32xf32> -> vector<32x32xf32>
    %c0_21 = arith.constant 0 : index
    %c0_22 = arith.constant 0 : index
    %c0_23 = arith.constant 0 : index
    %32 = vector.load %arg8[%c0_21, %c0_22, %c0_23] : memref<2x32x32xf32, #tpu.memory_space<vmem>>, vector<1x32x32xf32>
    %33 = vector.shape_cast %32 : vector<1x32x32xf32> to vector<32x32xf32>
    %34 = vector.shape_cast %31 : vector<32x32xf32> to vector<1x32x32xf32>
    tpu.vector_store %arg8[%c0_21, %c0_22, %c0_23], %34 {strides = array<i32>} : memref<2x32x32xf32, #tpu.memory_space<vmem>>, vector<1x32x32xf32>,
    %35 = vector.extract_strided_slice %29 {offsets = [8, 0], sizes = [8, 32], strides = [1, 1]} : vector<16x32xf32> to vector<8x32xf32>
    %cst_24 = arith.constant dense<0.000000e+00> : vector<32x32xf32>
    %36 = tpu.matmul %35, %35, %cst_24 {dimension_numbers = #tpu.dot_dimension_numbers<[0], [0], [1], [1], [0, 1, 1, 1], [], []>} : vector<8x32xf32>, vector<8x32xf32>, vector<32x32xf32> -> vector<32x32xf32>
    %c1 = arith.constant 1 : index
    %c0_25 = arith.constant 0 : index
    %c0_26 = arith.constant 0 : index
    %37 = vector.load %arg8[%c1, %c0_25, %c0_26] : memref<2x32x32xf32, #tpu.memory_space<vmem>>, vector<1x32x32xf32>
    %38 = vector.shape_cast %37 : vector<1x32x32xf32> to vector<32x32xf32>
    %39 = vector.shape_cast %36 : vector<32x32xf32> to vector<1x32x32xf32>
    tpu.vector_store %arg8[%c1, %c0_25, %c0_26], %39 {strides = array<i32>} : memref<2x32x32xf32, #tpu.memory_space<vmem>>, vector<1x32x32xf32>,
    return
  }
  func.func @transform_0(%arg0: i32) -> (i32, i32) {
    %c0_i32 = arith.constant 0 : i32
    %c0_i32_0 = arith.constant 0 : i32
    return %arg0, %c0_i32 : i32, i32
  }
  func.func @transform_1(%arg0: i32) -> (i32, i32) {
    %c0_i32 = arith.constant 0 : i32
    %c0_i32_0 = arith.constant 0 : i32
    %c0_i32_1 = arith.constant 0 : i32
    return %c0_i32, %c0_i32_0 : i32, i32
  }
  func.func @transform_2(%arg0: i32) -> (i32, i32) {
    %c0_i32 = arith.constant 0 : i32
    %c0_i32_0 = arith.constant 0 : i32
    %c0_i32_1 = arith.constant 0 : i32
    return %c0_i32, %c0_i32_0 : i32, i32
  }
  func.func @transform_3(%arg0: i32) -> (i32, i32) {
    %c0_i32 = arith.constant 0 : i32
    %c0_i32_0 = arith.constant 0 : i32
    %c0_i32_1 = arith.constant 0 : i32
    return %c0_i32, %c0_i32_0 : i32, i32
  }
  func.func @transform_4(%arg0: i32) -> (i32, i32) {
    %c0_i32 = arith.constant 0 : i32
    %c0_i32_0 = arith.constant 0 : i32
    %c0_i32_1 = arith.constant 0 : i32
    return %c0_i32, %c0_i32_0 : i32, i32
  }
  func.func @transform_5(%arg0: i32) -> (i32, i32) {
    %c0_i32 = arith.constant 0 : i32
    %c0_i32_0 = arith.constant 0 : i32
    %c0_i32_1 = arith.constant 0 : i32
    return %c0_i32, %c0_i32_0 : i32, i32
  }
  func.func @transform_6(%arg0: i32) -> (i32, i32) {
    %c0_i32 = arith.constant 0 : i32
    %c0_i32_0 = arith.constant 0 : i32
    %c0_i32_1 = arith.constant 0 : i32
    return %c0_i32, %c0_i32_0 : i32, i32
  }
  func.func @transform_7(%arg0: i32) -> (i32, i32, i32) {
    %c0_i32 = arith.constant 0 : i32
    %c0_i32_0 = arith.constant 0 : i32
    %c0_i32_1 = arith.constant 0 : i32
    return %arg0, %c0_i32, %c0_i32_0 : i32, i32, i32
  }
}

module attributes {stable_mosaic.version = 11 : i64} {
  func.func @_gcn_layer_kernel(%arg0: i32, %arg1: i32, %arg2: memref<16x32xf32, #tpu.memory_space<vmem>>, %arg3: memref<32x16xf32, #tpu.memory_space<vmem>>, %arg4: memref<16x128xf32, #tpu.memory_space<vmem>>, %arg5: memref<1x128xf32, #tpu.memory_space<vmem>>, %arg6: memref<16x128xf32, #tpu.memory_space<vmem>>, %arg7: memref<16x16xf32, #tpu.memory_space<vmem>>) attributes {dimension_semantics = [#tpu.dimension_semantics<parallel>, #tpu.dimension_semantics<arbitrary>], iteration_bounds = array<i64: 2, 1>, scalar_prefetch = 0 : i64, scratch_operands = 1 : i64, tpu.core_type = #tpu.core_type<tc>, window_params = [{transform_indices = @transform_0, window_bounds = array<i64: 16, 32>}, {pipeline_mode = #tpu.pipeline_mode<synchronous>, transform_indices = @transform_1, window_bounds = array<i64: 32, 16>}, {pipeline_mode = #tpu.pipeline_mode<synchronous>, transform_indices = @transform_2, window_bounds = array<i64: 16, 128>}, {pipeline_mode = #tpu.pipeline_mode<synchronous>, transform_indices = @transform_3, window_bounds = array<i64: 1, 128>}, {transform_indices = @transform_4, window_bounds = array<i64: 16, 128>}]} {
    %c0_i32 = arith.constant 0 : i32
    %0 = arith.cmpi eq, %arg1, %c0_i32 : i32
    %1 = arith.extui %0 : i1 to i32
    %c0_i32_0 = arith.constant 0 : i32
    %2 = arith.cmpi ne, %1, %c0_i32_0 : i32
    scf.if %2 {
      %cst_9 = arith.constant 0.000000e+00 : f32
      %14 = vector.broadcast %cst_9 : f32 to vector<16x16xf32>
      %c0_10 = arith.constant 0 : index
      %c0_11 = arith.constant 0 : index
      %15 = vector.load %arg7[%c0_10, %c0_11] : memref<16x16xf32, #tpu.memory_space<vmem>>, vector<16x16xf32>
      tpu.vector_store %arg7[%c0_10, %c0_11], %14 {strides = array<i32>} : memref<16x16xf32, #tpu.memory_space<vmem>>, vector<16x16xf32>,
    } else {
    }
    %c32_i32 = arith.constant 32 : i32
    %3 = arith.muli %arg1, %c32_i32 : i32
    %4 = arith.index_cast %3 : i32 to index
    %c0 = arith.constant 0 : index
    %5 = vector.load %arg3[%4, %c0] : memref<32x16xf32, #tpu.memory_space<vmem>>, vector<32x16xf32>
    %c0_1 = arith.constant 0 : index
    %c0_2 = arith.constant 0 : index
    %6 = vector.load %arg7[%c0_1, %c0_2] : memref<16x16xf32, #tpu.memory_space<vmem>>, vector<16x16xf32>
    %c0_3 = arith.constant 0 : index
    %c0_4 = arith.constant 0 : index
    %7 = vector.load %arg2[%c0_3, %c0_4] : memref<16x32xf32, #tpu.memory_space<vmem>>, vector<16x32xf32>
    %cst = arith.constant dense<0.000000e+00> : vector<16x16xf32>
    %8 = tpu.matmul %7, %5, %cst {dimension_numbers = #tpu.dot_dimension_numbers<[1], [0], [0], [1], [0, 0, 1, 1], [], []>} : vector<16x32xf32>, vector<32x16xf32>, vector<16x16xf32> -> vector<16x16xf32>
    %9 = arith.addf %6, %8 : vector<16x16xf32>
    %c0_5 = arith.constant 0 : index
    %c0_6 = arith.constant 0 : index
    %10 = vector.load %arg7[%c0_5, %c0_6] : memref<16x16xf32, #tpu.memory_space<vmem>>, vector<16x16xf32>
    tpu.vector_store %arg7[%c0_5, %c0_6], %9 {strides = array<i32>} : memref<16x16xf32, #tpu.memory_space<vmem>>, vector<16x16xf32>,
    %c0_i32_7 = arith.constant 0 : i32
    %11 = arith.cmpi eq, %arg1, %c0_i32_7 : i32
    %12 = arith.extui %11 : i1 to i32
    %c0_i32_8 = arith.constant 0 : i32
    %13 = arith.cmpi ne, %12, %c0_i32_8 : i32
    scf.if %13 {
      %c0_9 = arith.constant 0 : index
      %c0_10 = arith.constant 0 : index
      %14 = vector.load %arg7[%c0_9, %c0_10] : memref<16x16xf32, #tpu.memory_space<vmem>>, vector<16x16xf32>
      %c0_11 = arith.constant 0 : index
      %c0_12 = arith.constant 0 : index
      %15 = vector.load %arg4[%c0_11, %c0_12] : memref<16x128xf32, #tpu.memory_space<vmem>>, vector<16x128xf32>
      %cst_13 = arith.constant dense<0.000000e+00> : vector<16x128xf32>
      %16 = tpu.matmul %14, %15, %cst_13 {dimension_numbers = #tpu.dot_dimension_numbers<[1], [0], [0], [1], [0, 0, 1, 1], [], []>} : vector<16x16xf32>, vector<16x128xf32>, vector<16x128xf32> -> vector<16x128xf32>
      %c0_14 = arith.constant 0 : index
      %c0_15 = arith.constant 0 : index
      %17 = vector.load %arg5[%c0_14, %c0_15] : memref<1x128xf32, #tpu.memory_space<vmem>>, vector<1x128xf32>
      %18 = vector.broadcast %17 : vector<1x128xf32> to vector<16x128xf32>
      %19 = arith.addf %16, %18 : vector<16x128xf32>
      %cst_16 = arith.constant 0.000000e+00 : f32
      %20 = vector.broadcast %cst_16 : f32 to vector<16x128xf32>
      %21 = arith.maximumf %19, %20 : vector<16x128xf32>
      %c0_17 = arith.constant 0 : index
      %c0_18 = arith.constant 0 : index
      %22 = vector.load %arg6[%c0_17, %c0_18] : memref<16x128xf32, #tpu.memory_space<vmem>>, vector<16x128xf32>
      tpu.vector_store %arg6[%c0_17, %c0_18], %21 {strides = array<i32>} : memref<16x128xf32, #tpu.memory_space<vmem>>, vector<16x128xf32>,
    } else {
    }
    return
  }
  func.func @transform_0(%arg0: i32, %arg1: i32) -> (i32, i32) {
    %c0_i32 = arith.constant 0 : i32
    return %arg0, %arg1 : i32, i32
  }
  func.func @transform_1(%arg0: i32, %arg1: i32) -> (i32, i32) {
    %c0_i32 = arith.constant 0 : i32
    %c0_i32_0 = arith.constant 0 : i32
    %c0_i32_1 = arith.constant 0 : i32
    return %c0_i32, %c0_i32_0 : i32, i32
  }
  func.func @transform_2(%arg0: i32, %arg1: i32) -> (i32, i32) {
    %c0_i32 = arith.constant 0 : i32
    %c0_i32_0 = arith.constant 0 : i32
    %c0_i32_1 = arith.constant 0 : i32
    return %c0_i32, %c0_i32_0 : i32, i32
  }
  func.func @transform_3(%arg0: i32, %arg1: i32) -> (i32, i32) {
    %c0_i32 = arith.constant 0 : i32
    %c0_i32_0 = arith.constant 0 : i32
    %c0_i32_1 = arith.constant 0 : i32
    return %c0_i32, %c0_i32_0 : i32, i32
  }
  func.func @transform_4(%arg0: i32, %arg1: i32) -> (i32, i32) {
    %c0_i32 = arith.constant 0 : i32
    %c0_i32_0 = arith.constant 0 : i32
    return %arg0, %c0_i32 : i32, i32
  }
}

module attributes {stable_mosaic.version = 11 : i64} {
  func.func @_gcn_layer_kernel(%arg0: i32, %arg1: i32, %arg2: memref<16x32xf32, #tpu.memory_space<vmem>>, %arg3: memref<32x128xf32, #tpu.memory_space<vmem>>, %arg4: memref<128x128xf32, #tpu.memory_space<vmem>>, %arg5: memref<1x128xf32, #tpu.memory_space<vmem>>, %arg6: memref<16x128xf32, #tpu.memory_space<vmem>>, %arg7: memref<16x128xf32, #tpu.memory_space<vmem>>) attributes {dimension_semantics = [#tpu.dimension_semantics<parallel>, #tpu.dimension_semantics<arbitrary>], iteration_bounds = array<i64: 2, 1>, scalar_prefetch = 0 : i64, scratch_operands = 1 : i64, tpu.core_type = #tpu.core_type<tc>, window_params = [{transform_indices = @transform_0, window_bounds = array<i64: 16, 32>}, {pipeline_mode = #tpu.pipeline_mode<synchronous>, transform_indices = @transform_1, window_bounds = array<i64: 32, 128>}, {pipeline_mode = #tpu.pipeline_mode<synchronous>, transform_indices = @transform_2, window_bounds = array<i64: 128, 128>}, {pipeline_mode = #tpu.pipeline_mode<synchronous>, transform_indices = @transform_3, window_bounds = array<i64: 1, 128>}, {transform_indices = @transform_4, window_bounds = array<i64: 16, 128>}]} {
    %c0_i32 = arith.constant 0 : i32
    %0 = arith.cmpi eq, %arg1, %c0_i32 : i32
    %1 = arith.extui %0 : i1 to i32
    %c0_i32_0 = arith.constant 0 : i32
    %2 = arith.cmpi ne, %1, %c0_i32_0 : i32
    scf.if %2 {
      %cst_9 = arith.constant 0.000000e+00 : f32
      %14 = vector.broadcast %cst_9 : f32 to vector<16x128xf32>
      %c0_10 = arith.constant 0 : index
      %c0_11 = arith.constant 0 : index
      %15 = vector.load %arg7[%c0_10, %c0_11] : memref<16x128xf32, #tpu.memory_space<vmem>>, vector<16x128xf32>
      tpu.vector_store %arg7[%c0_10, %c0_11], %14 {strides = array<i32>} : memref<16x128xf32, #tpu.memory_space<vmem>>, vector<16x128xf32>,
    } else {
    }
    %c32_i32 = arith.constant 32 : i32
    %3 = arith.muli %arg1, %c32_i32 : i32
    %4 = arith.index_cast %3 : i32 to index
    %c0 = arith.constant 0 : index
    %5 = vector.load %arg3[%4, %c0] : memref<32x128xf32, #tpu.memory_space<vmem>>, vector<32x128xf32>
    %c0_1 = arith.constant 0 : index
    %c0_2 = arith.constant 0 : index
    %6 = vector.load %arg7[%c0_1, %c0_2] : memref<16x128xf32, #tpu.memory_space<vmem>>, vector<16x128xf32>
    %c0_3 = arith.constant 0 : index
    %c0_4 = arith.constant 0 : index
    %7 = vector.load %arg2[%c0_3, %c0_4] : memref<16x32xf32, #tpu.memory_space<vmem>>, vector<16x32xf32>
    %cst = arith.constant dense<0.000000e+00> : vector<16x128xf32>
    %8 = tpu.matmul %7, %5, %cst {dimension_numbers = #tpu.dot_dimension_numbers<[1], [0], [0], [1], [0, 0, 1, 1], [], []>} : vector<16x32xf32>, vector<32x128xf32>, vector<16x128xf32> -> vector<16x128xf32>
    %9 = arith.addf %6, %8 : vector<16x128xf32>
    %c0_5 = arith.constant 0 : index
    %c0_6 = arith.constant 0 : index
    %10 = vector.load %arg7[%c0_5, %c0_6] : memref<16x128xf32, #tpu.memory_space<vmem>>, vector<16x128xf32>
    tpu.vector_store %arg7[%c0_5, %c0_6], %9 {strides = array<i32>} : memref<16x128xf32, #tpu.memory_space<vmem>>, vector<16x128xf32>,
    %c0_i32_7 = arith.constant 0 : i32
    %11 = arith.cmpi eq, %arg1, %c0_i32_7 : i32
    %12 = arith.extui %11 : i1 to i32
    %c0_i32_8 = arith.constant 0 : i32
    %13 = arith.cmpi ne, %12, %c0_i32_8 : i32
    scf.if %13 {
      %c0_9 = arith.constant 0 : index
      %c0_10 = arith.constant 0 : index
      %14 = vector.load %arg7[%c0_9, %c0_10] : memref<16x128xf32, #tpu.memory_space<vmem>>, vector<16x128xf32>
      %c0_11 = arith.constant 0 : index
      %c0_12 = arith.constant 0 : index
      %15 = vector.load %arg4[%c0_11, %c0_12] : memref<128x128xf32, #tpu.memory_space<vmem>>, vector<128x128xf32>
      %cst_13 = arith.constant dense<0.000000e+00> : vector<16x128xf32>
      %16 = tpu.matmul %14, %15, %cst_13 {dimension_numbers = #tpu.dot_dimension_numbers<[1], [0], [0], [1], [0, 0, 1, 1], [], []>} : vector<16x128xf32>, vector<128x128xf32>, vector<16x128xf32> -> vector<16x128xf32>
      %c0_14 = arith.constant 0 : index
      %c0_15 = arith.constant 0 : index
      %17 = vector.load %arg5[%c0_14, %c0_15] : memref<1x128xf32, #tpu.memory_space<vmem>>, vector<1x128xf32>
      %18 = vector.broadcast %17 : vector<1x128xf32> to vector<16x128xf32>
      %19 = arith.addf %16, %18 : vector<16x128xf32>
      %cst_16 = arith.constant 0.000000e+00 : f32
      %20 = vector.broadcast %cst_16 : f32 to vector<16x128xf32>
      %21 = arith.maximumf %19, %20 : vector<16x128xf32>
      %c0_17 = arith.constant 0 : index
      %c0_18 = arith.constant 0 : index
      %22 = vector.load %arg6[%c0_17, %c0_18] : memref<16x128xf32, #tpu.memory_space<vmem>>, vector<16x128xf32>
      tpu.vector_store %arg6[%c0_17, %c0_18], %21 {strides = array<i32>} : memref<16x128xf32, #tpu.memory_space<vmem>>, vector<16x128xf32>,
    } else {
    }
    return
  }
  func.func @transform_0(%arg0: i32, %arg1: i32) -> (i32, i32) {
    %c0_i32 = arith.constant 0 : i32
    return %arg0, %arg1 : i32, i32
  }
  func.func @transform_1(%arg0: i32, %arg1: i32) -> (i32, i32) {
    %c0_i32 = arith.constant 0 : i32
    %c0_i32_0 = arith.constant 0 : i32
    %c0_i32_1 = arith.constant 0 : i32
    return %c0_i32, %c0_i32_0 : i32, i32
  }
  func.func @transform_2(%arg0: i32, %arg1: i32) -> (i32, i32) {
    %c0_i32 = arith.constant 0 : i32
    %c0_i32_0 = arith.constant 0 : i32
    %c0_i32_1 = arith.constant 0 : i32
    return %c0_i32, %c0_i32_0 : i32, i32
  }
  func.func @transform_3(%arg0: i32, %arg1: i32) -> (i32, i32) {
    %c0_i32 = arith.constant 0 : i32
    %c0_i32_0 = arith.constant 0 : i32
    %c0_i32_1 = arith.constant 0 : i32
    return %c0_i32, %c0_i32_0 : i32, i32
  }
  func.func @transform_4(%arg0: i32, %arg1: i32) -> (i32, i32) {
    %c0_i32 = arith.constant 0 : i32
    %c0_i32_0 = arith.constant 0 : i32
    return %arg0, %c0_i32 : i32, i32
  }
}

module attributes {stable_mosaic.version = 11 : i64} {
  func.func @_mlp_kernel(%arg0: i32, %arg1: memref<4x1024xf32, #tpu.memory_space<vmem>>, %arg2: memref<1024x32xf32, #tpu.memory_space<vmem>>, %arg3: memref<1x32xf32, #tpu.memory_space<vmem>>, %arg4: memref<32x32xf32, #tpu.memory_space<vmem>>, %arg5: memref<1x32xf32, #tpu.memory_space<vmem>>, %arg6: memref<32x128xf32, #tpu.memory_space<vmem>>, %arg7: memref<1x128xf32, #tpu.memory_space<vmem>>, %arg8: memref<4x128xf32, #tpu.memory_space<vmem>>) attributes {dimension_semantics = [#tpu.dimension_semantics<arbitrary>], iteration_bounds = array<i64: 1>, scalar_prefetch = 0 : i64, scratch_operands = 0 : i64, tpu.core_type = #tpu.core_type<tc>, window_params = [{pipeline_mode = #tpu.pipeline_mode<synchronous>, transform_indices = @transform_0, window_bounds = array<i64: 4, 1024>}, {pipeline_mode = #tpu.pipeline_mode<synchronous>, transform_indices = @transform_1, window_bounds = array<i64: 1024, 32>}, {pipeline_mode = #tpu.pipeline_mode<synchronous>, transform_indices = @transform_2, window_bounds = array<i64: 1, 32>}, {pipeline_mode = #tpu.pipeline_mode<synchronous>, transform_indices = @transform_3, window_bounds = array<i64: 32, 32>}, {pipeline_mode = #tpu.pipeline_mode<synchronous>, transform_indices = @transform_4, window_bounds = array<i64: 1, 32>}, {pipeline_mode = #tpu.pipeline_mode<synchronous>, transform_indices = @transform_5, window_bounds = array<i64: 32, 128>}, {pipeline_mode = #tpu.pipeline_mode<synchronous>, transform_indices = @transform_6, window_bounds = array<i64: 1, 128>}, {pipeline_mode = #tpu.pipeline_mode<synchronous>, transform_indices = @transform_7, window_bounds = array<i64: 4, 128>}]} {
    %c0 = arith.constant 0 : index
    %c0_0 = arith.constant 0 : index
    %0 = vector.load %arg1[%c0, %c0_0] : memref<4x1024xf32, #tpu.memory_space<vmem>>, vector<4x1024xf32>
    %c0_1 = arith.constant 0 : index
    %c0_2 = arith.constant 0 : index
    %1 = vector.load %arg2[%c0_1, %c0_2] : memref<1024x32xf32, #tpu.memory_space<vmem>>, vector<1024x32xf32>
    %cst = arith.constant dense<0.000000e+00> : vector<4x32xf32>
    %2 = tpu.matmul %0, %1, %cst {dimension_numbers = #tpu.dot_dimension_numbers<[1], [0], [0], [1], [0, 0, 1, 1], [], []>} : vector<4x1024xf32>, vector<1024x32xf32>, vector<4x32xf32> -> vector<4x32xf32>
    %c0_3 = arith.constant 0 : index
    %c0_4 = arith.constant 0 : index
    %3 = vector.load %arg3[%c0_3, %c0_4] : memref<1x32xf32, #tpu.memory_space<vmem>>, vector<1x32xf32>
    %4 = vector.broadcast %3 : vector<1x32xf32> to vector<4x32xf32>
    %5 = arith.addf %2, %4 : vector<4x32xf32>
    %cst_5 = arith.constant 0.000000e+00 : f32
    %6 = vector.broadcast %cst_5 : f32 to vector<4x32xf32>
    %7 = arith.maximumf %5, %6 : vector<4x32xf32>
    %c0_6 = arith.constant 0 : index
    %c0_7 = arith.constant 0 : index
    %8 = vector.load %arg4[%c0_6, %c0_7] : memref<32x32xf32, #tpu.memory_space<vmem>>, vector<32x32xf32>
    %cst_8 = arith.constant dense<0.000000e+00> : vector<4x32xf32>
    %9 = tpu.matmul %7, %8, %cst_8 {dimension_numbers = #tpu.dot_dimension_numbers<[1], [0], [0], [1], [0, 0, 1, 1], [], []>} : vector<4x32xf32>, vector<32x32xf32>, vector<4x32xf32> -> vector<4x32xf32>
    %c0_9 = arith.constant 0 : index
    %c0_10 = arith.constant 0 : index
    %10 = vector.load %arg5[%c0_9, %c0_10] : memref<1x32xf32, #tpu.memory_space<vmem>>, vector<1x32xf32>
    %11 = vector.broadcast %10 : vector<1x32xf32> to vector<4x32xf32>
    %12 = arith.addf %9, %11 : vector<4x32xf32>
    %cst_11 = arith.constant 0.000000e+00 : f32
    %13 = vector.broadcast %cst_11 : f32 to vector<4x32xf32>
    %14 = arith.maximumf %12, %13 : vector<4x32xf32>
    %c0_12 = arith.constant 0 : index
    %c0_13 = arith.constant 0 : index
    %15 = vector.load %arg6[%c0_12, %c0_13] : memref<32x128xf32, #tpu.memory_space<vmem>>, vector<32x128xf32>
    %cst_14 = arith.constant dense<0.000000e+00> : vector<4x128xf32>
    %16 = tpu.matmul %14, %15, %cst_14 {dimension_numbers = #tpu.dot_dimension_numbers<[1], [0], [0], [1], [0, 0, 1, 1], [], []>} : vector<4x32xf32>, vector<32x128xf32>, vector<4x128xf32> -> vector<4x128xf32>
    %c0_15 = arith.constant 0 : index
    %c0_16 = arith.constant 0 : index
    %17 = vector.load %arg7[%c0_15, %c0_16] : memref<1x128xf32, #tpu.memory_space<vmem>>, vector<1x128xf32>
    %18 = vector.broadcast %17 : vector<1x128xf32> to vector<4x128xf32>
    %19 = arith.addf %16, %18 : vector<4x128xf32>
    %cst_17 = arith.constant 0.000000e+00 : f32
    %20 = vector.broadcast %cst_17 : f32 to vector<4x128xf32>
    %21 = arith.maximumf %19, %20 : vector<4x128xf32>
    %c0_18 = arith.constant 0 : index
    %c0_19 = arith.constant 0 : index
    %22 = vector.load %arg8[%c0_18, %c0_19] : memref<4x128xf32, #tpu.memory_space<vmem>>, vector<4x128xf32>
    tpu.vector_store %arg8[%c0_18, %c0_19], %21 {strides = array<i32>} : memref<4x128xf32, #tpu.memory_space<vmem>>, vector<4x128xf32>,
    return
  }
  func.func @transform_0(%arg0: i32) -> (i32, i32) {
    %c0_i32 = arith.constant 0 : i32
    %c0_i32_0 = arith.constant 0 : i32
    %c0_i32_1 = arith.constant 0 : i32
    return %c0_i32, %c0_i32_0 : i32, i32
  }
  func.func @transform_1(%arg0: i32) -> (i32, i32) {
    %c0_i32 = arith.constant 0 : i32
    %c0_i32_0 = arith.constant 0 : i32
    %c0_i32_1 = arith.constant 0 : i32
    return %c0_i32, %c0_i32_0 : i32, i32
  }
  func.func @transform_2(%arg0: i32) -> (i32, i32) {
    %c0_i32 = arith.constant 0 : i32
    %c0_i32_0 = arith.constant 0 : i32
    %c0_i32_1 = arith.constant 0 : i32
    return %c0_i32, %c0_i32_0 : i32, i32
  }
  func.func @transform_3(%arg0: i32) -> (i32, i32) {
    %c0_i32 = arith.constant 0 : i32
    %c0_i32_0 = arith.constant 0 : i32
    %c0_i32_1 = arith.constant 0 : i32
    return %c0_i32, %c0_i32_0 : i32, i32
  }
  func.func @transform_4(%arg0: i32) -> (i32, i32) {
    %c0_i32 = arith.constant 0 : i32
    %c0_i32_0 = arith.constant 0 : i32
    %c0_i32_1 = arith.constant 0 : i32
    return %c0_i32, %c0_i32_0 : i32, i32
  }
  func.func @transform_5(%arg0: i32) -> (i32, i32) {
    %c0_i32 = arith.constant 0 : i32
    %c0_i32_0 = arith.constant 0 : i32
    %c0_i32_1 = arith.constant 0 : i32
    return %c0_i32, %c0_i32_0 : i32, i32
  }
  func.func @transform_6(%arg0: i32) -> (i32, i32) {
    %c0_i32 = arith.constant 0 : i32
    %c0_i32_0 = arith.constant 0 : i32
    %c0_i32_1 = arith.constant 0 : i32
    return %c0_i32, %c0_i32_0 : i32, i32
  }
  func.func @transform_7(%arg0: i32) -> (i32, i32) {
    %c0_i32 = arith.constant 0 : i32
    %c0_i32_0 = arith.constant 0 : i32
    %c0_i32_1 = arith.constant 0 : i32
    return %c0_i32, %c0_i32_0 : i32, i32
  }
}

</mosaic_0001>

<llo_original>
// kernel: gnn_forward.6
$region0: #{gnn_forward.6}
  #allocation0 [shape = 'u32[]', space=smem, size = 0x4, offset = 0x4, fixed_abs, tag = 'smem constant byte address 0x4 - core index']
  #allocation1 [shape = 'u32[72,128]{1,0:T(1,128)}', space=vmem, size = 0x9000, scoped, tag = 'internal scratch']
  %s0 = inlined_call_operand.vmem [shape: f32[32,128], index: 0, kind: input, shape index: {}]
  %s1 = inlined_call_operand.vmem [shape: f32[128,32], index: 1, kind: input, shape index: {}]
  %s2 = inlined_call_operand.vmem [shape: f32[1,32], index: 2, kind: input, shape index: {}]
  %s3 = inlined_call_operand.hbm [shape: f32[32,32], index: 3, kind: input, shape index: {}]
  %s4 = inlined_call_operand.hbm [shape: f32[1,32], index: 4, kind: input, shape index: {}]
  %s5 = inlined_call_operand.hbm [shape: f32[32,32], index: 5, kind: input, shape index: {}]
  %s6 = inlined_call_operand.vmem [shape: f32[1,32], index: 6, kind: input, shape index: {}]
  %s7 = inlined_call_operand.vmem [shape: f32[4,32,32], index: 7, kind: output, shape index: {}]
  %s8 = sld [smem:[#allocation0]]
  $region73: #{gnn_forward.6} parent=0
    _
  %s10 = ssub.s32 1, %s8
  %s11 = scalar_select 0, %s10, %s8
  $region1: #{gnn_forward.6} parent=0
    #allocation2 [shape = 'u8[16384]{0}', space=vmem, size = 0x4000, scoped, tag = 'input window, operand 3, single buffered']
    #allocation3 [shape = 's32[2]{0}', space=sflag, size = 0x8, scoped, tag = 'scoped memory for gnn_forward.6']
    #allocation4 [shape = 'u8[512]{0}', space=vmem, size = 0x400, scoped, tag = 'input window, operand 4, single buffered']
    #allocation5 [shape = 's32[1]{0}', space=sflag, size = 0x4, scoped, tag = 'scoped memory for gnn_forward.6']
    #allocation6 [shape = 'u8[16384]{0}', space=vmem, size = 0x4000, scoped, tag = 'input window, operand 5, single buffered']
    %12 = vsyncpa [#allocation3], 0
    %13 = vsyncpa [#allocation5], 0
    loop: start=0, step=1, limit=4
    $region2: #{gnn_forward.6} parent=1 // loop_pre_header
      _
    $region3: #{gnn_forward.6} parent=1 // loop_header
      %s15 = sphi 0, %s19
      %p16 = scmp.ge.s32.totalorder %s15, 4
      %s25 = sphi 0, %s27
      %s28 = sphi 0, %s25
      %s29 = sphi 0, %s28
      %s45 = sphi 0, %s29
      %s49 = sphi 0, %s49
      %s51 = sphi 0, %s49
      %s52 = sphi 0, %s51
      %s66 = sphi 0, %s52
      %s70 = sphi 0, %s70
      %s72 = sphi 0, %s70
      %s73 = sphi 0, %s72
      %s87 = sphi 0, %s73
      %s91 = sphi 0, %s91
      %s93 = sphi 0, %s91
      %s94 = sphi 0, %s93
      %s108 = sphi 0, %s94
      %s112 = sphi 0, %s112
      %s114 = sphi 0, %s112
      %s115 = sphi 0, %s114
      %s129 = sphi 0, %s115
      %s133 = sphi 0, %s133
      %s135 = sphi 0, %s133
      %s136 = sphi 0, %s135
      %s150 = sphi 0, %s136
      %s154 = sphi 0, %s154
      %s156 = sphi 0, %s154
      %s157 = sphi 0, %s156
      %s171 = sphi 0, %s157
      %s177 = sphi 0, %s179
      %s180 = sphi 0, %s177
      %s181 = sphi 0, %s180
      %s197 = sphi 0, %s181
    $region4: #{gnn_forward.6} parent=1 // loop_header_branch
      %18 = sbr.rel (%p16) target = $region8
    $region5: #{gnn_forward.6} parent=1 // loop_body
      %s20 = ssub.s32 %s15, 1
      %s21 = ssub.s32 %s15, 2
      %s22 = sadd.s32 %s15, 1
      %s23 = ssub.s32 %s15, %s22
      %p24 = scmp.eq.s32.totalorder %s23, 0
      %s26 = sadd.s32 %s25, 1
      %s27 = scalar_select %p24, %s25, %s26
      %p30 = pneg %p24
      %p31 = scmp.eq.s32.totalorder %s15, 1
      %p32 = por %p30, %p31
      %p33 = scmp.ne.s32.totalorder %s25, %s28
      %p34 = scmp.eq.s32.totalorder %s15, 0
      %p35 = por %p33, %p34
      %p36 = scmp.ne.s32.totalorder %s25, %s28
      %p37 = scmp.eq.s32.totalorder %s20, 1
      %p38 = por %p36, %p37
      %p39 = scmp.ne.s32.totalorder %s28, %s29
      %p40 = scmp.eq.s32.totalorder %s20, 0
      %p41 = por %p39, %p40
      %p42 = scmp.ne.s32.totalorder %s28, %s29
      %p43 = scmp.eq.s32.totalorder %s21, 1
      %p44 = por %p42, %p43
      %p46 = scmp.ne.s32.totalorder %s29, %s45
      %p47 = scmp.eq.s32.totalorder %s21, 0
      %p48 = por %p46, %p47
      %s50 = sadd.s32 %s49, 1
      %p53 = scmp.eq.s32.totalorder %s15, 1
      %p54 = scmp.ne.s32.totalorder %s49, %s51
      %p55 = scmp.eq.s32.totalorder %s15, 0
      %p56 = por %p54, %p55
      %p57 = scmp.ne.s32.totalorder %s49, %s51
      %p58 = scmp.eq.s32.totalorder %s20, 1
      %p59 = por %p57, %p58
      %p60 = scmp.ne.s32.totalorder %s51, %s52
      %p61 = scmp.eq.s32.totalorder %s20, 0
      %p62 = por %p60, %p61
      %p63 = scmp.ne.s32.totalorder %s51, %s52
      %p64 = scmp.eq.s32.totalorder %s21, 1
      %p65 = por %p63, %p64
      %p67 = scmp.ne.s32.totalorder %s52, %s66
      %p68 = scmp.eq.s32.totalorder %s21, 0
      %p69 = por %p67, %p68
      %s71 = sadd.s32 %s70, 1
      %p74 = scmp.eq.s32.totalorder %s15, 1
      %p75 = scmp.ne.s32.totalorder %s70, %s72
      %p76 = scmp.eq.s32.totalorder %s15, 0
      %p77 = por %p75, %p76
      %p78 = scmp.ne.s32.totalorder %s70, %s72
      %p79 = scmp.eq.s32.totalorder %s20, 1
      %p80 = por %p78, %p79
      %p81 = scmp.ne.s32.totalorder %s72, %s73
      %p82 = scmp.eq.s32.totalorder %s20, 0
      %p83 = por %p81, %p82
      %p84 = scmp.ne.s32.totalorder %s72, %s73
      %p85 = scmp.eq.s32.totalorder %s21, 1
      %p86 = por %p84, %p85
      %p88 = scmp.ne.s32.totalorder %s73, %s87
      %p89 = scmp.eq.s32.totalorder %s21, 0
      %p90 = por %p88, %p89
      %s92 = sadd.s32 %s91, 1
      %p95 = scmp.eq.s32.totalorder %s15, 1
      %p96 = scmp.ne.s32.totalorder %s91, %s93
      %p97 = scmp.eq.s32.totalorder %s15, 0
      %p98 = por %p96, %p97
      %p99 = scmp.ne.s32.totalorder %s91, %s93
      %p100 = scmp.eq.s32.totalorder %s20, 1
      %p101 = por %p99, %p100
      %p102 = scmp.ne.s32.totalorder %s93, %s94
      %p103 = scmp.eq.s32.totalorder %s20, 0
      %p104 = por %p102, %p103
      %p105 = scmp.ne.s32.totalorder %s93, %s94
      %p106 = scmp.eq.s32.totalorder %s21, 1
      %p107 = por %p105, %p106
      %p109 = scmp.ne.s32.totalorder %s94, %s108
      %p110 = scmp.eq.s32.totalorder %s21, 0
      %p111 = por %p109, %p110
      %s113 = sadd.s32 %s112, 1
      %p116 = scmp.eq.s32.totalorder %s15, 1
      %p117 = scmp.ne.s32.totalorder %s112, %s114
      %p118 = scmp.eq.s32.totalorder %s15, 0
      %p119 = por %p117, %p118
      %p120 = scmp.ne.s32.totalorder %s112, %s114
      %p121 = scmp.eq.s32.totalorder %s20, 1
      %p122 = por %p120, %p121
      %p123 = scmp.ne.s32.totalorder %s114, %s115
      %p124 = scmp.eq.s32.totalorder %s20, 0
      %p125 = por %p123, %p124
      %p126 = scmp.ne.s32.totalorder %s114, %s115
      %p127 = scmp.eq.s32.totalorder %s21, 1
      %p128 = por %p126, %p127
      %p130 = scmp.ne.s32.totalorder %s115, %s129
      %p131 = scmp.eq.s32.totalorder %s21, 0
      %p132 = por %p130, %p131
      %s134 = sadd.s32 %s133, 1
      %p137 = scmp.eq.s32.totalorder %s15, 1
      %p138 = scmp.ne.s32.totalorder %s133, %s135
      %p139 = scmp.eq.s32.totalorder %s15, 0
      %p140 = por %p138, %p139
      %p141 = scmp.ne.s32.totalorder %s133, %s135
      %p142 = scmp.eq.s32.totalorder %s20, 1
      %p143 = por %p141, %p142
      %p144 = scmp.ne.s32.totalorder %s135, %s136
      %p145 = scmp.eq.s32.totalorder %s20, 0
      %p146 = por %p144, %p145
      %p147 = scmp.ne.s32.totalorder %s135, %s136
      %p148 = scmp.eq.s32.totalorder %s21, 1
      %p149 = por %p147, %p148
      %p151 = scmp.ne.s32.totalorder %s136, %s150
      %p152 = scmp.eq.s32.totalorder %s21, 0
      %p153 = por %p151, %p152
      %s155 = sadd.s32 %s154, 1
      %p158 = scmp.eq.s32.totalorder %s15, 1
      %p159 = scmp.ne.s32.totalorder %s154, %s156
      %p160 = scmp.eq.s32.totalorder %s15, 0
      %p161 = por %p159, %p160
      %p162 = scmp.ne.s32.totalorder %s154, %s156
      %p163 = scmp.eq.s32.totalorder %s20, 1
      %p164 = por %p162, %p163
      %p165 = scmp.ne.s32.totalorder %s156, %s157
      %p166 = scmp.eq.s32.totalorder %s20, 0
      %p167 = por %p165, %p166
      %p168 = scmp.ne.s32.totalorder %s156, %s157
      %p169 = scmp.eq.s32.totalorder %s21, 1
      %p170 = por %p168, %p169
      %p172 = scmp.ne.s32.totalorder %s157, %s171
      %p173 = scmp.eq.s32.totalorder %s21, 0
      %p174 = por %p172, %p173
      %s175 = ssub.s32 %s15, %s22
      %p176 = scmp.eq.s32.totalorder %s175, 0
      %s178 = sadd.s32 %s177, 1
      %s179 = scalar_select %p176, %s177, %s178
      %p182 = pneg %p176
      %p183 = scmp.eq.s32.totalorder %s15, 1
      %p184 = por %p182, %p183
      %p185 = scmp.ne.s32.totalorder %s177, %s180
      %p186 = scmp.eq.s32.totalorder %s15, 0
      %p187 = por %p185, %p186
      %p188 = scmp.ne.s32.totalorder %s177, %s180
      %p189 = scmp.eq.s32.totalorder %s20, 1
      %p190 = por %p188, %p189
      %p191 = scmp.ne.s32.totalorder %s180, %s181
      %p192 = scmp.eq.s32.totalorder %s20, 0
      %p193 = por %p191, %p192
      %p194 = scmp.ne.s32.totalorder %s180, %s181
      %p195 = scmp.eq.s32.totalorder %s21, 1
      %p196 = por %p194, %p195
      %p198 = scmp.ne.s32.totalorder %s181, %s197
      %p199 = scmp.eq.s32.totalorder %s21, 0
      %p200 = por %p198, %p199
      %p201 = scmp.le.s32.totalorder 1, %s15
      %p202 = scmp.lt.s32.totalorder %s15, 3
      %p203 = pnand %p201, %p202
      %p204 = pneg %p203
      // Predicated region
      $region9: #{gnn_forward.6} parent=5 // pred_check
        _
      $region10: #{gnn_forward.6} parent=5 // pred_check_branch
        %206 = sbr.rel (%p203) target = $region12
      $region11: #{gnn_forward.6} parent=5 // pred_region
        %s207 = ssub.s32 %s15, 1
        // Predicated region
        $region13: #{gnn_forward.6} parent=11 // pred_check
          %p208 = pneg %p62
        $region14: #{gnn_forward.6} parent=11 // pred_check_branch
          %210 = sbr.rel (%p208) target = $region16
        $region15: #{gnn_forward.6} parent=11 // pred_region
          _
        $region16: #{gnn_forward.6} parent=11 // pred_fallthru
          _
        // Predicated region
        $region17: #{gnn_forward.6} parent=11 // pred_check
          %p211 = pneg %p83
        $region18: #{gnn_forward.6} parent=11 // pred_check_branch
          %213 = sbr.rel (%p211) target = $region20
        $region19: #{gnn_forward.6} parent=11 // pred_region
          _
        $region20: #{gnn_forward.6} parent=11 // pred_fallthru
          _
        // Predicated region
        $region21: #{gnn_forward.6} parent=11 // pred_check
          %p214 = pneg %p104
        $region22: #{gnn_forward.6} parent=11 // pred_check_branch
          %216 = sbr.rel (%p214) target = $region24
        $region23: #{gnn_forward.6} parent=11 // pred_region
          %218 = vsyncadd [#allocation3], 0
          %s219 = sshll.u32 %s3, 4
          %s220 = int_to_ptr.hbm [resolvable:$true] %s219
          %s221 = sshll.u32 [#allocation2], 4
          %s222 = int_to_ptr.vmem [resolvable:$true] %s221
          %227 = dma.hbm_to_vmem [thread:$0]  %s220, 512, %s222, [#allocation3], 128, 128, 8
        $region24: #{gnn_forward.6} parent=11 // pred_fallthru
          _
        // Predicated region
        $region25: #{gnn_forward.6} parent=11 // pred_check
          %p228 = pneg %p125
        $region26: #{gnn_forward.6} parent=11 // pred_check_branch
          %230 = sbr.rel (%p228) target = $region28
        $region27: #{gnn_forward.6} parent=11 // pred_region
          %232 = vsyncadd [#allocation5], 0
          %s234 = sshll.u32 %s4, 4
          %s235 = int_to_ptr.hbm [resolvable:$true] %s234
          %s236 = sshll.u32 [#allocation4], 4
          %s237 = int_to_ptr.vmem [resolvable:$true] %s236
          %239 = dma.hbm_to_vmem [thread:$0]  %s235, 16, %s237, [#allocation5]
        $region28: #{gnn_forward.6} parent=11 // pred_fallthru
          _
        // Predicated region
        $region29: #{gnn_forward.6} parent=11 // pred_check
          %p240 = pneg %p146
        $region30: #{gnn_forward.6} parent=11 // pred_check_branch
          %242 = sbr.rel (%p240) target = $region32
        $region31: #{gnn_forward.6} parent=11 // pred_region
          %244 = vsyncadd [#allocation5], 0
          %s245 = sshll.u32 %s5, 4
          %s246 = int_to_ptr.hbm [resolvable:$true] %s245
          %s247 = sshll.u32 [#allocation6], 4
          %s248 = int_to_ptr.vmem [resolvable:$true] %s247
          %253 = dma.hbm_to_vmem [thread:$0]  %s246, 512, %s248, [#allocation5], 128, 128, 8
        $region32: #{gnn_forward.6} parent=11 // pred_fallthru
          _
        // Predicated region
        $region33: #{gnn_forward.6} parent=11 // pred_check
          %p254 = pneg %p167
        $region34: #{gnn_forward.6} parent=11 // pred_check_branch
          %256 = sbr.rel (%p254) target = $region36
        $region35: #{gnn_forward.6} parent=11 // pred_region
          _
        $region36: #{gnn_forward.6} parent=11 // pred_fallthru
          _
      $region12: #{gnn_forward.6} parent=5 // pred_fallthru
        _
      %p257 = scmp.lt.s32.totalorder %s15, 2
      // Predicated region
      $region37: #{gnn_forward.6} parent=5 // pred_check
        %p258 = pneg %p257
      $region38: #{gnn_forward.6} parent=5 // pred_check_branch
        %260 = sbr.rel (%p258) target = $region40
      $region39: #{gnn_forward.6} parent=5 // pred_region
        // Predicated region
        $region41: #{gnn_forward.6} parent=39 // pred_check
          %p261 = pneg %p35
        $region42: #{gnn_forward.6} parent=39 // pred_check_branch
          %263 = sbr.rel (%p261) target = $region44
        $region43: #{gnn_forward.6} parent=39 // pred_region
          %s264 = smul.u32 2, %s15
          %p265 = scmp.lt.s32.totalorder %s264, 3
          %s266 = scalar_select %p265, %s264, 3
          %s267 = smul.addr %s266, 8
          %s268 = scalar_lea.vmem %s0, %s267
          %s269 = smul.u32 2, %s15
        $region44: #{gnn_forward.6} parent=39 // pred_fallthru
          _
      $region40: #{gnn_forward.6} parent=5 // pred_fallthru
        _
      %p270 = scmp.le.s32.totalorder 1, %s15
      %p271 = scmp.lt.s32.totalorder %s15, 3
      %p272 = pnand %p270, %p271
      %p273 = pneg %p272
      // Predicated region
      $region45: #{gnn_forward.6} parent=5 // pred_check
        _
      $region46: #{gnn_forward.6} parent=5 // pred_check_branch
        %275 = sbr.rel (%p272) target = $region48
      $region47: #{gnn_forward.6} parent=5 // pred_region
        %s276 = ssub.s32 %s15, 1
        // Predicated region
        $region49: #{gnn_forward.6} parent=47 // pred_check
          %p277 = pneg %p104
        $region50: #{gnn_forward.6} parent=47 // pred_check_branch
          %279 = sbr.rel (%p277) target = $region52
        $region51: #{gnn_forward.6} parent=47 // pred_region
          %281 = dma.done [#allocation3], 512
        $region52: #{gnn_forward.6} parent=47 // pred_fallthru
          _
        // Predicated region
        $region53: #{gnn_forward.6} parent=47 // pred_check
          %p282 = pneg %p125
        $region54: #{gnn_forward.6} parent=47 // pred_check_branch
          %284 = sbr.rel (%p282) target = $region56
        $region55: #{gnn_forward.6} parent=47 // pred_region
          %286 = dma.done [#allocation5], 16
        $region56: #{gnn_forward.6} parent=47 // pred_fallthru
          _
        // Predicated region
        $region57: #{gnn_forward.6} parent=47 // pred_check
          %p287 = pneg %p146
        $region58: #{gnn_forward.6} parent=47 // pred_check_branch
          %289 = sbr.rel (%p287) target = $region60
        $region59: #{gnn_forward.6} parent=47 // pred_region
          %291 = dma.done [#allocation5], 512
        $region60: #{gnn_forward.6} parent=47 // pred_fallthru
          _
        %s292 = smul.u32 2, %s20
        %p293 = scmp.lt.s32.totalorder %s292, 3
        %s294 = scalar_select %p293, %s292, 3
        %s295 = smul.addr %s294, 8
        %s296 = scalar_lea.vmem %s0, %s295
        %p297 = pneg %p41
        %p298 = pneg %p38
        %p299 = pneg %p62
        %p300 = pneg %p59
        %p301 = pneg %p83
        %p302 = pneg %p80
        %p303 = pneg %p104
        %p304 = pneg %p101
        %p305 = pneg %p125
        %p306 = pneg %p122
        %p307 = pneg %p146
        %p308 = pneg %p143
        %p309 = pneg %p167
        %p310 = pneg %p164
        %p311 = pneg %p193
        %p312 = pneg %p190
        %s313 = smul.u32 2, %s20
        %p314 = scmp.lt.s32.totalorder %s313, 3
        %s315 = scalar_select %p314, %s313, 3
        %s316 = smul.addr %s315, 4
        %s317 = smul.addr %s316, 8
        %s318 = scalar_lea.vmem %s7, %s317
        %s319 = smul.u32 2, %s20
        %p320 = scmp.lt.s32.totalorder %s319, 3
        %s321 = scalar_select %p320, %s319, 3
        %s322 = smul.addr %s321, 8
        %s323 = scalar_lea.vmem %s0, %s322
        %s324 = smul.u32 2, %s20
        %s325 = smul.u32 2, %s20
        %p326 = scmp.lt.s32.totalorder %s325, 3
        %s327 = scalar_select %p326, %s325, 3
        %s328 = smul.addr %s327, 4
        %s329 = smul.addr %s328, 8
        %s330 = scalar_lea.vmem %s7, %s329
        %s331 = smul.u32 2, %s20
        %v332 = vld [vmem:[%s323] sm:$0xff]
        %v333 = vld [vmem:[%s323 + $0x8] sm:$0xff]
        %v334 = vmul.f32 %v332, %v332
        %v335 = vmul.f32 %v333, %v333
        %336 = vadd.xlane.f32.xlu0 %v334
        %v337 = vpop.xlane.xlu0 %336
        %338 = vadd.xlane.f32.xlu0 %v335
        %v339 = vpop.xlane.xlu0 %338
        %v340 = vmax.f32 %v337, 1e-24
        %v341 = vmax.f32 %v339, 1e-24
        %v342 = vrsqrt.pop %v340
        %v343 = vmul.f32 %v342, %v340
        %v344 = vmul.f32 %v343, %v342
        %v345 = vmul.f32 0.5, %v344
        %v346 = vsub.f32 1.5, %v345
        %v347 = vmul.f32 %v342, %v346
        %vm348 = vweird.f32 %v340
        %vm349 = vweird.f32 %v342
        %vm350 = vmor %vm348, %vm349
        %v351 = vsel %vm350, %v342, %v347
        %v352 = vrsqrt.pop %v341
        %v353 = vmul.f32 %v352, %v341
        %v354 = vmul.f32 %v353, %v352
        %v355 = vmul.f32 0.5, %v354
        %v356 = vsub.f32 1.5, %v355
        %v357 = vmul.f32 %v352, %v356
        %vm358 = vweird.f32 %v341
        %vm359 = vweird.f32 %v352
        %vm360 = vmor %vm358, %vm359
        %v361 = vsel %vm360, %v352, %v357
        %v362 = vmul.f32 %v332, %v351
        %v363 = vmul.f32 %v333, %v361
        %v364 = vld [vmem:[%s1] sm:$0xff]
        %v365 = vld [vmem:[%s1 + $0x8] sm:$0xff]
        %v366 = vld [vmem:[%s1 + $0x10] sm:$0xff]
        %v367 = vld [vmem:[%s1 + $0x18] sm:$0xff]
        %v368 = vld [vmem:[%s1 + $0x20] sm:$0xff]
        %v369 = vld [vmem:[%s1 + $0x28] sm:$0xff]
        %v370 = vld [vmem:[%s1 + $0x30] sm:$0xff]
        %v371 = vld [vmem:[%s1 + $0x38] sm:$0xff]
        %v372 = vld [vmem:[%s1 + $0x40] sm:$0xff]
        %v373 = vld [vmem:[%s1 + $0x48] sm:$0xff]
        %v374 = vld [vmem:[%s1 + $0x50] sm:$0xff]
        %v375 = vld [vmem:[%s1 + $0x58] sm:$0xff]
        %v376 = vld [vmem:[%s1 + $0x60] sm:$0xff]
        %v377 = vld [vmem:[%s1 + $0x68] sm:$0xff]
        %v378 = vld [vmem:[%s1 + $0x70] sm:$0xff]
        %v379 = vld [vmem:[%s1 + $0x78] sm:$0xff]
        %v380 = vld [vmem:[%s2] sm:$0x1]
        %v382 = vperm.slane %v380, 0
        %384 = vmatpush.msra.mxu0 %v379
        %385 = vmatpush.msra.mxu0 %v378
        %386 = vmatpush.msra.mxu0 %v377
        %387 = vmatpush.msra.mxu0 %v376
        %388 = vmatpush.msra.mxu0 %v375
        %389 = vmatpush.msra.mxu0 %v374
        %390 = vmatpush.msra.mxu0 %v373
        %391 = vmatpush.msra.mxu0 %v372
        %392 = vmatpush.msra.mxu0 %v371
        %393 = vmatpush.msra.mxu0 %v370
        %394 = vmatpush.msra.mxu0 %v369
        %395 = vmatpush.msra.mxu0 %v368
        %396 = vmatpush.msra.mxu0 %v367
        %397 = vmatpush.msra.mxu0 %v366
        %398 = vmatpush.msra.mxu0 %v365
        %399 = vmatpush.msra.mxu0 %v364
        %400 = vmatmul.f32.gmra.mxu0 %v362
        %v401 = vpop.f32.mrf.mxu0
        %v402 = vadd.f32 %v382, %v401
        %403 = vmatmul.f32.gmra.mxu0 %v363
        %v404 = vpop.f32.mrf.mxu0
        %v405 = vadd.f32 %v382, %v404
        %406 = vdwg.mxu0
        %v407 = vmax.f32 %v402, 0.0
        %v408 = vmax.f32 %v405, 0.0
        %v409 = vld [vmem:[#allocation2] sm:$0xff]
        %v410 = vld [vmem:[#allocation2 + $0x8] sm:$0xff]
        %v411 = vld [vmem:[#allocation2 + $0x10] sm:$0xff]
        %v412 = vld [vmem:[#allocation2 + $0x18] sm:$0xff]
        %v413 = vld [vmem:[#allocation4] sm:$0x1]
        %v415 = vperm.slane %v413, 0
        %vm417 = vcmask 261120
        %v419 = vsel %vm417, %v407, 0
        %v422 = vsel %vm417, %v408, 0
        %424 = vmatpush.msra.mxu0 0.0
        %425 = vmatpush.msra.mxu0 0.0
        %426 = vmatpush.msra.mxu0 0.0
        %427 = vmatpush.msra.mxu0 0.0
        %428 = vmatpush.msra.mxu0 0.0
        %429 = vmatpush.msra.mxu0 0.0
        %430 = vmatpush.msra.mxu0 0.0
        %431 = vmatpush.msra.mxu0 0.0
        %432 = vmatpush.msra.mxu0 0.0
        %433 = vmatpush.msra.mxu0 0.0
        %434 = vmatpush.msra.mxu0 0.0
        %435 = vmatpush.msra.mxu0 0.0
        %436 = vmatpush.msra.mxu0 %v412
        %437 = vmatpush.msra.mxu0 %v411
        %438 = vmatpush.msra.mxu0 %v410
        %439 = vmatpush.msra.mxu0 %v409
        %440 = vmatmul.f32.gmra.mxu0 %v419
        %v441 = vpop.f32.mrf.mxu0
        %v442 = vadd.f32 %v415, %v441
        %443 = vmatmul.f32.gmra.mxu0 %v422
        %v444 = vpop.f32.mrf.mxu0
        %v445 = vadd.f32 %v415, %v444
        %446 = vdwg.mxu0
        %v447 = vmax.f32 %v442, 0.0
        %v448 = vmax.f32 %v445, 0.0
        %v449 = vld [vmem:[#allocation6] sm:$0xff]
        %v450 = vld [vmem:[#allocation6 + $0x8] sm:$0xff]
        %v451 = vld [vmem:[#allocation6 + $0x10] sm:$0xff]
        %v452 = vld [vmem:[#allocation6 + $0x18] sm:$0xff]
        %v453 = vld [vmem:[%s6] sm:$0x1]
        %v455 = vperm.slane %v453, 0
        %v458 = vsel %vm417, %v447, 0
        %v461 = vsel %vm417, %v448, 0
        %463 = vmatpush.msra.mxu0 0.0
        %464 = vmatpush.msra.mxu0 0.0
        %465 = vmatpush.msra.mxu0 0.0
        %466 = vmatpush.msra.mxu0 0.0
        %467 = vmatpush.msra.mxu0 0.0
        %468 = vmatpush.msra.mxu0 0.0
        %469 = vmatpush.msra.mxu0 0.0
        %470 = vmatpush.msra.mxu0 0.0
        %471 = vmatpush.msra.mxu0 0.0
        %472 = vmatpush.msra.mxu0 0.0
        %473 = vmatpush.msra.mxu0 0.0
        %474 = vmatpush.msra.mxu0 0.0
        %475 = vmatpush.msra.mxu0 %v452
        %476 = vmatpush.msra.mxu0 %v451
        %477 = vmatpush.msra.mxu0 %v450
        %478 = vmatpush.msra.mxu0 %v449
        %479 = vmatmul.f32.gmra.mxu0 %v458
        %v480 = vpop.f32.mrf.mxu0
        %v481 = vadd.f32 %v455, %v480
        %482 = vmatmul.f32.gmra.mxu0 %v461
        %v483 = vpop.f32.mrf.mxu0
        %v484 = vadd.f32 %v455, %v483
        %485 = vdwg.mxu0
        %v486 = vmax.f32 %v481, 0.0
        %v487 = vmax.f32 %v484, 0.0
        %488 = vxpose.xlu0.b32.start [1/16] %v486, 128
        %489 = vxpose.xlu0.b32.cont [2/16] 0.0, 128
        %490 = vxpose.xlu0.b32.cont [3/16] 0.0, 128
        %491 = vxpose.xlu0.b32.cont [4/16] 0.0, 128
        %492 = vxpose.xlu0.b32.cont [5/16] 0.0, 128
        %493 = vxpose.xlu0.b32.cont [6/16] 0.0, 128
        %494 = vxpose.xlu0.b32.cont [7/16] 0.0, 128
        %495 = vxpose.xlu0.b32.cont [8/16] 0.0, 128
        %496 = vxpose.xlu0.b32.cont [9/16] 0.0, 128
        %497 = vxpose.xlu0.b32.cont [10/16] 0.0, 128
        %498 = vxpose.xlu0.b32.cont [11/16] 0.0, 128
        %499 = vxpose.xlu0.b32.cont [12/16] 0.0, 128
        %500 = vxpose.xlu0.b32.cont [13/16] 0.0, 128
        %501 = vxpose.xlu0.b32.cont [14/16] 0.0, 128
        %502 = vxpose.xlu0.b32.cont [15/16] 0.0, 128
        %503 = vxpose.xlu0.b32.end [16/16] 0.0, 128
        %v504 = vpop.trf.xlu0
        %v505 = vpop.trf.xlu0
        %v506 = vpop.trf.xlu0
        %v507 = vpop.trf.xlu0
        %v508 = vpop.trf.xlu0
        %v509 = vpop.trf.xlu0
        %v510 = vpop.trf.xlu0
        %v511 = vpop.trf.xlu0
        %v512 = vpop.trf.xlu0
        %v513 = vpop.trf.xlu0
        %v514 = vpop.trf.xlu0
        %v515 = vpop.trf.xlu0
        %v516 = vpop.trf.xlu0
        %v517 = vpop.trf.xlu0
        %v518 = vpop.trf.xlu0
        %v519 = vpop.trf.xlu0
        %vm520 = vcmask 64512
        %v522 = vsel %vm520, %v504, 0
        %v525 = vsel %vm520, %v505, 0
        %v528 = vsel %vm520, %v506, 0
        %v531 = vsel %vm520, %v507, 0
        %533 = vmatpush.msra.mxu0 0.0
        %534 = vmatpush.msra.mxu0 0.0
        %535 = vmatpush.msra.mxu0 0.0
        %536 = vmatpush.msra.mxu0 0.0
        %537 = vmatpush.msra.mxu0 0.0
        %538 = vmatpush.msra.mxu0 0.0
        %539 = vmatpush.msra.mxu0 0.0
        %540 = vmatpush.msra.mxu0 0.0
        %541 = vmatpush.msra.mxu0 0.0
        %542 = vmatpush.msra.mxu0 0.0
        %543 = vmatpush.msra.mxu0 0.0
        %544 = vmatpush.msra.mxu0 0.0
        %545 = vmatpush.msra.mxu0 0.0
        %546 = vmatpush.msra.mxu0 0.0
        %547 = vmatpush.msra.mxu0 0.0
        %548 = vmatpush.msra.mxu0 %v486
        %549 = vmatmul.f32.gmra.mxu0 %v522
        %v550 = vpop.f32.mrf.mxu0
        %v551 = vadd.f32 0.0, %v550
        %552 = vmatmul.f32.gmra.mxu0 %v525
        %v553 = vpop.f32.mrf.mxu0
        %v554 = vadd.f32 0.0, %v553
        %555 = vmatmul.f32.gmra.mxu0 %v528
        %v556 = vpop.f32.mrf.mxu0
        %v557 = vadd.f32 0.0, %v556
        %558 = vmatmul.f32.gmra.mxu0 %v531
        %v559 = vpop.f32.mrf.mxu0
        %v560 = vadd.f32 0.0, %v559
        %561 = vdwg.mxu0
        %562 = vst.msk [vmem:[%s330] sm:$0xff] %vm417, %v551
        %563 = vst.msk [vmem:[%s330 + $0x8] sm:$0xff] %vm417, %v554
        %564 = vst.msk [vmem:[%s330 + $0x10] sm:$0xff] %vm417, %v557
        %565 = vst.msk [vmem:[%s330 + $0x18] sm:$0xff] %vm417, %v560
        %566 = vxpose.xlu0.b32.start [1/16] %v487, 128
        %567 = vxpose.xlu0.b32.cont [2/16] 0.0, 128
        %568 = vxpose.xlu0.b32.cont [3/16] 0.0, 128
        %569 = vxpose.xlu0.b32.cont [4/16] 0.0, 128
        %570 = vxpose.xlu0.b32.cont [5/16] 0.0, 128
        %571 = vxpose.xlu0.b32.cont [6/16] 0.0, 128
        %572 = vxpose.xlu0.b32.cont [7/16] 0.0, 128
        %573 = vxpose.xlu0.b32.cont [8/16] 0.0, 128
        %574 = vxpose.xlu0.b32.cont [9/16] 0.0, 128
        %575 = vxpose.xlu0.b32.cont [10/16] 0.0, 128
        %576 = vxpose.xlu0.b32.cont [11/16] 0.0, 128
        %577 = vxpose.xlu0.b32.cont [12/16] 0.0, 128
        %578 = vxpose.xlu0.b32.cont [13/16] 0.0, 128
        %579 = vxpose.xlu0.b32.cont [14/16] 0.0, 128
        %580 = vxpose.xlu0.b32.cont [15/16] 0.0, 128
        %581 = vxpose.xlu0.b32.end [16/16] 0.0, 128
        %v582 = vpop.trf.xlu0
        %v583 = vpop.trf.xlu0
        %v584 = vpop.trf.xlu0
        %v585 = vpop.trf.xlu0
        %v586 = vpop.trf.xlu0
        %v587 = vpop.trf.xlu0
        %v588 = vpop.trf.xlu0
        %v589 = vpop.trf.xlu0
        %v590 = vpop.trf.xlu0
        %v591 = vpop.trf.xlu0
        %v592 = vpop.trf.xlu0
        %v593 = vpop.trf.xlu0
        %v594 = vpop.trf.xlu0
        %v595 = vpop.trf.xlu0
        %v596 = vpop.trf.xlu0
        %v597 = vpop.trf.xlu0
        %v599 = vsel %vm520, %v582, 0
        %v602 = vsel %vm520, %v583, 0
        %v605 = vsel %vm520, %v584, 0
        %v608 = vsel %vm520, %v585, 0
        %610 = vmatpush.msra.mxu0 0.0
        %611 = vmatpush.msra.mxu0 0.0
        %612 = vmatpush.msra.mxu0 0.0
        %613 = vmatpush.msra.mxu0 0.0
        %614 = vmatpush.msra.mxu0 0.0
        %615 = vmatpush.msra.mxu0 0.0
        %616 = vmatpush.msra.mxu0 0.0
        %617 = vmatpush.msra.mxu0 0.0
        %618 = vmatpush.msra.mxu0 0.0
        %619 = vmatpush.msra.mxu0 0.0
        %620 = vmatpush.msra.mxu0 0.0
        %621 = vmatpush.msra.mxu0 0.0
        %622 = vmatpush.msra.mxu0 0.0
        %623 = vmatpush.msra.mxu0 0.0
        %624 = vmatpush.msra.mxu0 0.0
        %625 = vmatpush.msra.mxu0 %v487
        %626 = vmatmul.f32.gmra.mxu0 %v599
        %v627 = vpop.f32.mrf.mxu0
        %v628 = vadd.f32 0.0, %v627
        %629 = vmatmul.f32.gmra.mxu0 %v602
        %v630 = vpop.f32.mrf.mxu0
        %v631 = vadd.f32 0.0, %v630
        %632 = vmatmul.f32.gmra.mxu0 %v605
        %v633 = vpop.f32.mrf.mxu0
        %v634 = vadd.f32 0.0, %v633
        %635 = vmatmul.f32.gmra.mxu0 %v608
        %v636 = vpop.f32.mrf.mxu0
        %v637 = vadd.f32 0.0, %v636
        %638 = vdwg.mxu0
        %s639 = scalar_lea.vmem %s330, 32
        %640 = vst.msk [vmem:[%s639] sm:$0xff] %vm417, %v628
        %641 = vst.msk [vmem:[%s639 + $0x8] sm:$0xff] %vm417, %v631
        %642 = vst.msk [vmem:[%s639 + $0x10] sm:$0xff] %vm417, %v634
        %643 = vst.msk [vmem:[%s639 + $0x18] sm:$0xff] %vm417, %v637
        %s644 = smul.u32 2, %s20
        %p645 = scmp.lt.s32.totalorder %s644, 3
        %s646 = scalar_select %p645, %s644, 3
        %s647 = smul.addr %s646, 4
        %s648 = smul.addr %s647, 8
        %s649 = scalar_lea.vmem %s7, %s648
        // Predicated region
        $region61: #{gnn_forward.6} parent=47 // pred_check
          %p650 = pneg %p190
        $region62: #{gnn_forward.6} parent=47 // pred_check_branch
          %652 = sbr.rel (%p650) target = $region64
        $region63: #{gnn_forward.6} parent=47 // pred_region
          %s653 = smul.u32 2, %s20
        $region64: #{gnn_forward.6} parent=47 // pred_fallthru
          _
      $region48: #{gnn_forward.6} parent=5 // pred_fallthru
        _
      %p654 = scmp.le.s32.totalorder 2, %s15
      // Predicated region
      $region65: #{gnn_forward.6} parent=5 // pred_check
        %p655 = pneg %p654
      $region66: #{gnn_forward.6} parent=5 // pred_check_branch
        %657 = sbr.rel (%p655) target = $region68
      $region67: #{gnn_forward.6} parent=5 // pred_region
        %s658 = ssub.s32 %s15, 2
        // Predicated region
        $region69: #{gnn_forward.6} parent=67 // pred_check
          %p659 = pneg %p196
        $region70: #{gnn_forward.6} parent=67 // pred_check_branch
          %661 = sbr.rel (%p659) target = $region72
        $region71: #{gnn_forward.6} parent=67 // pred_region
          %s662 = smul.u32 2, %s21
          %p663 = scmp.lt.s32.totalorder %s662, 3
          %s664 = scalar_select %p663, %s662, 3
          %s665 = smul.addr %s664, 4
          %s666 = smul.addr %s665, 8
          %s667 = scalar_lea.vmem %s7, %s666
        $region72: #{gnn_forward.6} parent=67 // pred_fallthru
          _
      $region68: #{gnn_forward.6} parent=5 // pred_fallthru
        _
    $region6: #{gnn_forward.6} parent=1 // loop_footer
      %s19 = sadd.s32 1, %s15
    $region7: #{gnn_forward.6} parent=1 // loop_footer_branch
      %14 = sbr.rel target = $region3
    $region8: #{gnn_forward.6} parent=1 // loop_exit
      _
    %668 = vsyncpa [#allocation3], 1
    %s669 = scalar_lea.sflag [#allocation3], 1
    %670 = vsyncpa %s669, 1
    %671 = vsyncpa [#allocation5], 1

// kernel: gnn_forward.4
$region0: #{gnn_forward.4}
  #allocation0 [shape = 'u32[]', space=smem, size = 0x4, offset = 0x4, fixed_abs, tag = 'smem constant byte address 0x4 - core index']
  #allocation1 [shape = 'u32[72,128]{1,0:T(1,128)}', space=vmem, size = 0x9000, scoped, tag = 'internal scratch']
  #allocation2 [shape = 'f32[16,16]{1,0:T(8,128)}', space=vmem, size = 0x2000, scoped, tag = 'scratch operand']
  %s0 = inlined_call_operand.vmem [shape: f32[32,32], index: 0, kind: input, shape index: {}]
  %s1 = inlined_call_operand.vmem [shape: f32[32,16], index: 1, kind: input, shape index: {}]
  %s2 = inlined_call_operand.hbm [shape: f32[16,128], index: 2, kind: input, shape index: {}]
  %s3 = inlined_call_operand.hbm [shape: f32[1,128], index: 3, kind: input, shape index: {}]
  %s4 = inlined_call_operand.vmem [shape: f32[32,128], index: 4, kind: output, shape index: {}]
  %s5 = sld [smem:[#allocation0]]
  $region65: #{gnn_forward.4} parent=0
    _
  %s7 = ssub.s32 1, %s5
  %s8 = scalar_select 0, %s7, %s5
  $region1: #{gnn_forward.4} parent=0
    #allocation3 [shape = 'u8[8192]{0}', space=vmem, size = 0x2000, scoped, tag = 'input window, operand 2, single buffered']
    #allocation4 [shape = 's32[2]{0}', space=sflag, size = 0x8, scoped, tag = 'scoped memory for gnn_forward.4']
    #allocation5 [shape = 'u8[512]{0}', space=vmem, size = 0x400, scoped, tag = 'input window, operand 3, single buffered']
    #allocation6 [shape = 's32[1]{0}', space=sflag, size = 0x4, scoped, tag = 'scoped memory for gnn_forward.4']
    %9 = vsyncpa [#allocation4], 0
    %10 = vsyncpa [#allocation6], 0
    loop: start=0, step=1, limit=4
    $region2: #{gnn_forward.4} parent=1 // loop_pre_header
      _
    $region3: #{gnn_forward.4} parent=1 // loop_header
      %s12 = sphi 0, %s16
      %p13 = scmp.ge.s32.totalorder %s12, 4
      %s19 = sphi 0, %s31
      %s20 = sphi 0, %s27
      %s21 = sphi 0, %s19
      %s22 = sphi 0, %s20
      %s23 = sphi 0, %s21
      %s24 = sphi 0, %s22
      %s36 = sphi 0, %s38
      %s39 = sphi 0, %s36
      %s40 = sphi 0, %s39
      %s56 = sphi 0, %s40
      %s60 = sphi 0, %s60
      %s62 = sphi 0, %s60
      %s63 = sphi 0, %s62
      %s77 = sphi 0, %s63
      %s81 = sphi 0, %s81
      %s83 = sphi 0, %s81
      %s84 = sphi 0, %s83
      %s98 = sphi 0, %s84
      %s102 = sphi 0, %s102
      %s104 = sphi 0, %s102
      %s105 = sphi 0, %s104
      %s119 = sphi 0, %s105
      %s125 = sphi 0, %s127
      %s128 = sphi 0, %s125
      %s129 = sphi 0, %s128
      %s145 = sphi 0, %s129
    $region4: #{gnn_forward.4} parent=1 // loop_header_branch
      %15 = sbr.rel (%p13) target = $region8
    $region5: #{gnn_forward.4} parent=1 // loop_body
      %s17 = ssub.s32 %s12, 1
      %s18 = ssub.s32 %s12, 2
      %s25 = sadd.s32 1, %s20
      %p26 = scmp.ge.s32.totalorder %s25, 1
      %s27 = scalar_select %p26, 0, %s25
      %s28 = sadd.s32 1, %s19
      %s29 = scalar_select %p26, %s28, %s19
      %p30 = scmp.ge.s32.totalorder %s29, 2
      %s31 = scalar_select %p30, 0, %s29
      %s32 = ssub.s32 %s19, %s31
      %s33 = ssub.s32 %s20, %s27
      %s34 = sor.u32 %s32, %s33
      %p35 = scmp.eq.s32.totalorder %s34, 0
      %s37 = sadd.s32 %s36, 1
      %s38 = scalar_select %p35, %s36, %s37
      %p41 = pneg %p35
      %p42 = scmp.eq.s32.totalorder %s12, 1
      %p43 = por %p41, %p42
      %p44 = scmp.ne.s32.totalorder %s36, %s39
      %p45 = scmp.eq.s32.totalorder %s12, 0
      %p46 = por %p44, %p45
      %p47 = scmp.ne.s32.totalorder %s36, %s39
      %p48 = scmp.eq.s32.totalorder %s17, 1
      %p49 = por %p47, %p48
      %p50 = scmp.ne.s32.totalorder %s39, %s40
      %p51 = scmp.eq.s32.totalorder %s17, 0
      %p52 = por %p50, %p51
      %p53 = scmp.ne.s32.totalorder %s39, %s40
      %p54 = scmp.eq.s32.totalorder %s18, 1
      %p55 = por %p53, %p54
      %p57 = scmp.ne.s32.totalorder %s40, %s56
      %p58 = scmp.eq.s32.totalorder %s18, 0
      %p59 = por %p57, %p58
      %s61 = sadd.s32 %s60, 1
      %p64 = scmp.eq.s32.totalorder %s12, 1
      %p65 = scmp.ne.s32.totalorder %s60, %s62
      %p66 = scmp.eq.s32.totalorder %s12, 0
      %p67 = por %p65, %p66
      %p68 = scmp.ne.s32.totalorder %s60, %s62
      %p69 = scmp.eq.s32.totalorder %s17, 1
      %p70 = por %p68, %p69
      %p71 = scmp.ne.s32.totalorder %s62, %s63
      %p72 = scmp.eq.s32.totalorder %s17, 0
      %p73 = por %p71, %p72
      %p74 = scmp.ne.s32.totalorder %s62, %s63
      %p75 = scmp.eq.s32.totalorder %s18, 1
      %p76 = por %p74, %p75
      %p78 = scmp.ne.s32.totalorder %s63, %s77
      %p79 = scmp.eq.s32.totalorder %s18, 0
      %p80 = por %p78, %p79
      %s82 = sadd.s32 %s81, 1
      %p85 = scmp.eq.s32.totalorder %s12, 1
      %p86 = scmp.ne.s32.totalorder %s81, %s83
      %p87 = scmp.eq.s32.totalorder %s12, 0
      %p88 = por %p86, %p87
      %p89 = scmp.ne.s32.totalorder %s81, %s83
      %p90 = scmp.eq.s32.totalorder %s17, 1
      %p91 = por %p89, %p90
      %p92 = scmp.ne.s32.totalorder %s83, %s84
      %p93 = scmp.eq.s32.totalorder %s17, 0
      %p94 = por %p92, %p93
      %p95 = scmp.ne.s32.totalorder %s83, %s84
      %p96 = scmp.eq.s32.totalorder %s18, 1
      %p97 = por %p95, %p96
      %p99 = scmp.ne.s32.totalorder %s84, %s98
      %p100 = scmp.eq.s32.totalorder %s18, 0
      %p101 = por %p99, %p100
      %s103 = sadd.s32 %s102, 1
      %p106 = scmp.eq.s32.totalorder %s12, 1
      %p107 = scmp.ne.s32.totalorder %s102, %s104
      %p108 = scmp.eq.s32.totalorder %s12, 0
      %p109 = por %p107, %p108
      %p110 = scmp.ne.s32.totalorder %s102, %s104
      %p111 = scmp.eq.s32.totalorder %s17, 1
      %p112 = por %p110, %p111
      %p113 = scmp.ne.s32.totalorder %s104, %s105
      %p114 = scmp.eq.s32.totalorder %s17, 0
      %p115 = por %p113, %p114
      %p116 = scmp.ne.s32.totalorder %s104, %s105
      %p117 = scmp.eq.s32.totalorder %s18, 1
      %p118 = por %p116, %p117
      %p120 = scmp.ne.s32.totalorder %s105, %s119
      %p121 = scmp.eq.s32.totalorder %s18, 0
      %p122 = por %p120, %p121
      %s123 = ssub.s32 %s19, %s31
      %p124 = scmp.eq.s32.totalorder %s123, 0
      %s126 = sadd.s32 %s125, 1
      %s127 = scalar_select %p124, %s125, %s126
      %p130 = pneg %p124
      %p131 = scmp.eq.s32.totalorder %s12, 1
      %p132 = por %p130, %p131
      %p133 = scmp.ne.s32.totalorder %s125, %s128
      %p134 = scmp.eq.s32.totalorder %s12, 0
      %p135 = por %p133, %p134
      %p136 = scmp.ne.s32.totalorder %s125, %s128
      %p137 = scmp.eq.s32.totalorder %s17, 1
      %p138 = por %p136, %p137
      %p139 = scmp.ne.s32.totalorder %s128, %s129
      %p140 = scmp.eq.s32.totalorder %s17, 0
      %p141 = por %p139, %p140
      %p142 = scmp.ne.s32.totalorder %s128, %s129
      %p143 = scmp.eq.s32.totalorder %s18, 1
      %p144 = por %p142, %p143
      %p146 = scmp.ne.s32.totalorder %s129, %s145
      %p147 = scmp.eq.s32.totalorder %s18, 0
      %p148 = por %p146, %p147
      %p149 = scmp.le.s32.totalorder 1, %s12
      %p150 = scmp.lt.s32.totalorder %s12, 3
      %p151 = pnand %p149, %p150
      %p152 = pneg %p151
      // Predicated region
      $region9: #{gnn_forward.4} parent=5 // pred_check
        _
      $region10: #{gnn_forward.4} parent=5 // pred_check_branch
        %154 = sbr.rel (%p151) target = $region12
      $region11: #{gnn_forward.4} parent=5 // pred_region
        %s155 = ssub.s32 %s12, 1
        // Predicated region
        $region13: #{gnn_forward.4} parent=11 // pred_check
          %p156 = pneg %p73
        $region14: #{gnn_forward.4} parent=11 // pred_check_branch
          %158 = sbr.rel (%p156) target = $region16
        $region15: #{gnn_forward.4} parent=11 // pred_region
          _
        $region16: #{gnn_forward.4} parent=11 // pred_fallthru
          _
        // Predicated region
        $region17: #{gnn_forward.4} parent=11 // pred_check
          %p159 = pneg %p94
        $region18: #{gnn_forward.4} parent=11 // pred_check_branch
          %161 = sbr.rel (%p159) target = $region20
        $region19: #{gnn_forward.4} parent=11 // pred_region
          %163 = vsyncadd [#allocation4], 0
          %s164 = sshll.u32 %s2, 4
          %s165 = int_to_ptr.hbm [resolvable:$true] %s164
          %s166 = sshll.u32 [#allocation3], 4
          %s167 = int_to_ptr.vmem [resolvable:$true] %s166
          %172 = dma.hbm_to_vmem [thread:$0]  %s165, 256, %s167, [#allocation4], 128, 128, 8
        $region20: #{gnn_forward.4} parent=11 // pred_fallthru
          _
        // Predicated region
        $region21: #{gnn_forward.4} parent=11 // pred_check
          %p173 = pneg %p115
        $region22: #{gnn_forward.4} parent=11 // pred_check_branch
          %175 = sbr.rel (%p173) target = $region24
        $region23: #{gnn_forward.4} parent=11 // pred_region
          %177 = vsyncadd [#allocation6], 0
          %s179 = sshll.u32 %s3, 4
          %s180 = int_to_ptr.hbm [resolvable:$true] %s179
          %s181 = sshll.u32 [#allocation5], 4
          %s182 = int_to_ptr.vmem [resolvable:$true] %s181
          %184 = dma.hbm_to_vmem [thread:$0]  %s180, 16, %s182, [#allocation6]
        $region24: #{gnn_forward.4} parent=11 // pred_fallthru
          _
      $region12: #{gnn_forward.4} parent=5 // pred_fallthru
        _
      %p185 = scmp.lt.s32.totalorder %s12, 2
      // Predicated region
      $region25: #{gnn_forward.4} parent=5 // pred_check
        %p186 = pneg %p185
      $region26: #{gnn_forward.4} parent=5 // pred_check_branch
        %188 = sbr.rel (%p186) target = $region28
      $region27: #{gnn_forward.4} parent=5 // pred_region
        // Predicated region
        $region29: #{gnn_forward.4} parent=27 // pred_check
          %p189 = pneg %p46
        $region30: #{gnn_forward.4} parent=27 // pred_check_branch
          %191 = sbr.rel (%p189) target = $region32
        $region31: #{gnn_forward.4} parent=27 // pred_region
          %s192 = smul.u32 2, %s19
          %p193 = scmp.lt.s32.totalorder %s192, 3
          %s194 = scalar_select %p193, %s192, 3
          %p195 = scmp.lt.s32.totalorder %s20, 0
          %s196 = scalar_select %p195, %s20, 0
          %s197 = sadd.s32 %s196, %s194
          %s198 = smul.addr %s197, 8
          %s199 = scalar_lea.vmem %s0, %s198
          %s200 = smul.u32 2, %s19
        $region32: #{gnn_forward.4} parent=27 // pred_fallthru
          _
      $region28: #{gnn_forward.4} parent=5 // pred_fallthru
        _
      %p201 = scmp.le.s32.totalorder 1, %s12
      %p202 = scmp.lt.s32.totalorder %s12, 3
      %p203 = pnand %p201, %p202
      %p204 = pneg %p203
      // Predicated region
      $region33: #{gnn_forward.4} parent=5 // pred_check
        _
      $region34: #{gnn_forward.4} parent=5 // pred_check_branch
        %206 = sbr.rel (%p203) target = $region36
      $region35: #{gnn_forward.4} parent=5 // pred_region
        %s207 = ssub.s32 %s12, 1
        // Predicated region
        $region37: #{gnn_forward.4} parent=35 // pred_check
          %p208 = pneg %p94
        $region38: #{gnn_forward.4} parent=35 // pred_check_branch
          %210 = sbr.rel (%p208) target = $region40
        $region39: #{gnn_forward.4} parent=35 // pred_region
          %212 = dma.done [#allocation4], 256
        $region40: #{gnn_forward.4} parent=35 // pred_fallthru
          _
        // Predicated region
        $region41: #{gnn_forward.4} parent=35 // pred_check
          %p213 = pneg %p115
        $region42: #{gnn_forward.4} parent=35 // pred_check_branch
          %215 = sbr.rel (%p213) target = $region44
        $region43: #{gnn_forward.4} parent=35 // pred_region
          %217 = dma.done [#allocation6], 16
        $region44: #{gnn_forward.4} parent=35 // pred_fallthru
          _
        %s218 = smul.u32 2, %s21
        %p219 = scmp.lt.s32.totalorder %s218, 3
        %s220 = scalar_select %p219, %s218, 3
        %p221 = scmp.lt.s32.totalorder %s22, 0
        %s222 = scalar_select %p221, %s22, 0
        %s223 = sadd.s32 %s222, %s220
        %s224 = smul.addr %s223, 8
        %s225 = scalar_lea.vmem %s0, %s224
        %p226 = pneg %p52
        %p227 = pneg %p49
        %p228 = pneg %p73
        %p229 = pneg %p70
        %p230 = pneg %p94
        %p231 = pneg %p91
        %p232 = pneg %p115
        %p233 = pneg %p112
        %p234 = pneg %p141
        %p235 = pneg %p138
        %s236 = smul.u32 2, %s21
        %p237 = scmp.lt.s32.totalorder %s236, 3
        %s238 = scalar_select %p237, %s236, 3
        %s239 = smul.addr %s238, 8
        %s240 = scalar_lea.vmem %s4, %s239
        %s241 = smul.u32 2, %s21
        %p242 = scmp.lt.s32.totalorder %s241, 3
        %s243 = scalar_select %p242, %s241, 3
        %p244 = scmp.lt.s32.totalorder %s22, 0
        %s245 = scalar_select %p244, %s22, 0
        %s246 = sadd.s32 %s245, %s243
        %s247 = smul.addr %s246, 8
        %s248 = scalar_lea.vmem %s0, %s247
        %s249 = smul.u32 2, %s21
        %s250 = smul.u32 2, %s21
        %p251 = scmp.lt.s32.totalorder %s250, 3
        %s252 = scalar_select %p251, %s250, 3
        %s253 = smul.addr %s252, 8
        %s254 = scalar_lea.vmem %s4, %s253
        %s255 = smul.u32 2, %s21
        %p256 = scmp.eq.s32.totalorder %s22, 0
        // Predicated region
        $region45: #{gnn_forward.4} parent=35 // pred_check
          %p257 = pneg %p256
        $region46: #{gnn_forward.4} parent=35 // pred_check_branch
          %259 = sbr.rel (%p257) target = $region48
        $region47: #{gnn_forward.4} parent=35 // pred_region
          %vm260 = vcmask 130048
          %261 = vst.msk [vmem:[#allocation2] sm:$0xff] %vm260, 0.0
          %262 = vst.msk [vmem:[#allocation2 + $0x8] sm:$0xff] %vm260, 0.0
        $region48: #{gnn_forward.4} parent=35 // pred_fallthru
          _
        %s263 = smul.u32 %s22, 32
        %s264 = scalar_lea.vmem %s1, %s263
        %v265 = vld [vmem:[%s264] sm:$0xff]
        %v266 = vld [vmem:[%s264 + $0x8] sm:$0xff]
        %v267 = vld [vmem:[%s264 + $0x10] sm:$0xff]
        %v268 = vld [vmem:[%s264 + $0x18] sm:$0xff]
        %v269 = vld [vmem:[#allocation2] sm:$0xff]
        %v270 = vld [vmem:[#allocation2 + $0x8] sm:$0xff]
        %v271 = vld [vmem:[%s248] sm:$0xff]
        %v272 = vld [vmem:[%s248 + $0x8] sm:$0xff]
        %vm273 = vcmask 261120
        %v275 = vsel %vm273, %v271, 0
        %v278 = vsel %vm273, %v272, 0
        %280 = vmatpush.msra.mxu0 0.0
        %281 = vmatpush.msra.mxu0 0.0
        %282 = vmatpush.msra.mxu0 0.0
        %283 = vmatpush.msra.mxu0 0.0
        %284 = vmatpush.msra.mxu0 0.0
        %285 = vmatpush.msra.mxu0 0.0
        %286 = vmatpush.msra.mxu0 0.0
        %287 = vmatpush.msra.mxu0 0.0
        %288 = vmatpush.msra.mxu0 0.0
        %289 = vmatpush.msra.mxu0 0.0
        %290 = vmatpush.msra.mxu0 0.0
        %291 = vmatpush.msra.mxu0 0.0
        %292 = vmatpush.msra.mxu0 %v268
        %293 = vmatpush.msra.mxu0 %v267
        %294 = vmatpush.msra.mxu0 %v266
        %295 = vmatpush.msra.mxu0 %v265
        %296 = vmatmul.f32.gmra.mxu0 %v275
        %v297 = vpop.f32.mrf.mxu0
        %v298 = vadd.f32 0.0, %v297
        %299 = vmatmul.f32.gmra.mxu0 %v278
        %v300 = vpop.f32.mrf.mxu0
        %v301 = vadd.f32 0.0, %v300
        %302 = vdwg.mxu0
        %v303 = vadd.f32 %v269, %v298
        %v304 = vadd.f32 %v270, %v301
        %vm305 = vcmask 130048
        %306 = vst.msk [vmem:[#allocation2] sm:$0xff] %vm305, %v303
        %307 = vst.msk [vmem:[#allocation2 + $0x8] sm:$0xff] %vm305, %v304
        // Predicated region
        $region49: #{gnn_forward.4} parent=35 // pred_check
          %p308 = pneg %p256
        $region50: #{gnn_forward.4} parent=35 // pred_check_branch
          %310 = sbr.rel (%p308) target = $region52
        $region51: #{gnn_forward.4} parent=35 // pred_region
          %v311 = vld [vmem:[#allocation2] sm:$0xff]
          %v312 = vld [vmem:[#allocation2 + $0x8] sm:$0xff]
          %v313 = vld [vmem:[#allocation3] sm:$0xff]
          %v314 = vld [vmem:[#allocation3 + $0x8] sm:$0xff]
          %v315 = vld [vmem:[#allocation5] sm:$0x1]
          %v317 = vperm.slane %v315, 0
          %v320 = vsel %vm305, %v311, 0
          %v323 = vsel %vm305, %v312, 0
          %325 = vmatpush.msra.mxu0 0.0
          %326 = vmatpush.msra.mxu0 0.0
          %327 = vmatpush.msra.mxu0 0.0
          %328 = vmatpush.msra.mxu0 0.0
          %329 = vmatpush.msra.mxu0 0.0
          %330 = vmatpush.msra.mxu0 0.0
          %331 = vmatpush.msra.mxu0 0.0
          %332 = vmatpush.msra.mxu0 0.0
          %333 = vmatpush.msra.mxu0 0.0
          %334 = vmatpush.msra.mxu0 0.0
          %335 = vmatpush.msra.mxu0 0.0
          %336 = vmatpush.msra.mxu0 0.0
          %337 = vmatpush.msra.mxu0 0.0
          %338 = vmatpush.msra.mxu0 0.0
          %339 = vmatpush.msra.mxu0 %v314
          %340 = vmatpush.msra.mxu0 %v313
          %341 = vmatmul.f32.gmra.mxu0 %v320
          %v342 = vpop.f32.mrf.mxu0
          %v343 = vadd.f32 %v317, %v342
          %344 = vmatmul.f32.gmra.mxu0 %v323
          %v345 = vpop.f32.mrf.mxu0
          %v346 = vadd.f32 %v317, %v345
          %347 = vdwg.mxu0
          %v348 = vmax.f32 %v343, 0.0
          %v349 = vmax.f32 %v346, 0.0
          %350 = vst [vmem:[%s254] sm:$0xff] %v348
          %351 = vst [vmem:[%s254 + $0x8] sm:$0xff] %v349
        $region52: #{gnn_forward.4} parent=35 // pred_fallthru
          _
        %s352 = smul.u32 2, %s21
        %p353 = scmp.lt.s32.totalorder %s352, 3
        %s354 = scalar_select %p353, %s352, 3
        %s355 = smul.addr %s354, 8
        %s356 = scalar_lea.vmem %s4, %s355
        // Predicated region
        $region53: #{gnn_forward.4} parent=35 // pred_check
          %p357 = pneg %p138
        $region54: #{gnn_forward.4} parent=35 // pred_check_branch
          %359 = sbr.rel (%p357) target = $region56
        $region55: #{gnn_forward.4} parent=35 // pred_region
          %s360 = smul.u32 2, %s21
        $region56: #{gnn_forward.4} parent=35 // pred_fallthru
          _
      $region36: #{gnn_forward.4} parent=5 // pred_fallthru
        _
      %p361 = scmp.le.s32.totalorder 2, %s12
      // Predicated region
      $region57: #{gnn_forward.4} parent=5 // pred_check
        %p362 = pneg %p361
      $region58: #{gnn_forward.4} parent=5 // pred_check_branch
        %364 = sbr.rel (%p362) target = $region60
      $region59: #{gnn_forward.4} parent=5 // pred_region
        %s365 = ssub.s32 %s12, 2
        // Predicated region
        $region61: #{gnn_forward.4} parent=59 // pred_check
          %p366 = pneg %p144
        $region62: #{gnn_forward.4} parent=59 // pred_check_branch
          %368 = sbr.rel (%p366) target = $region64
        $region63: #{gnn_forward.4} parent=59 // pred_region
          %s369 = smul.u32 2, %s23
          %p370 = scmp.lt.s32.totalorder %s369, 3
          %s371 = scalar_select %p370, %s369, 3
          %s372 = smul.addr %s371, 8
          %s373 = scalar_lea.vmem %s4, %s372
        $region64: #{gnn_forward.4} parent=59 // pred_fallthru
          _
      $region60: #{gnn_forward.4} parent=5 // pred_fallthru
        _
    $region6: #{gnn_forward.4} parent=1 // loop_footer
      %s16 = sadd.s32 1, %s12
    $region7: #{gnn_forward.4} parent=1 // loop_footer_branch
      %11 = sbr.rel target = $region3
    $region8: #{gnn_forward.4} parent=1 // loop_exit
      _
    %374 = vsyncpa [#allocation4], 1
    %s375 = scalar_lea.sflag [#allocation4], 1
    %376 = vsyncpa %s375, 1
    %377 = vsyncpa [#allocation6], 1

// kernel: gnn_forward.5
$region0: #{gnn_forward.5}
  #allocation0 [shape = 'u32[]', space=smem, size = 0x4, offset = 0x4, fixed_abs, tag = 'smem constant byte address 0x4 - core index']
  #allocation1 [shape = 'u32[72,128]{1,0:T(1,128)}', space=vmem, size = 0x9000, scoped, tag = 'internal scratch']
  #allocation2 [shape = 'f32[16,128]{1,0:T(8,128)}', space=vmem, size = 0x2000, scoped, tag = 'scratch operand']
  %s0 = inlined_call_operand.vmem [shape: f32[32,32], index: 0, kind: input, shape index: {}]
  %s1 = inlined_call_operand.vmem [shape: f32[32,128], index: 1, kind: input, shape index: {}]
  %s2 = inlined_call_operand.hbm [shape: f32[128,128], index: 2, kind: input, shape index: {}]
  %s3 = inlined_call_operand.hbm [shape: f32[1,128], index: 3, kind: input, shape index: {}]
  %s4 = inlined_call_operand.vmem [shape: f32[32,128], index: 4, kind: output, shape index: {}]
  %s5 = sld [smem:[#allocation0]]
  $region65: #{gnn_forward.5} parent=0
    _
  %s7 = ssub.s32 1, %s5
  %s8 = scalar_select 0, %s7, %s5
  $region1: #{gnn_forward.5} parent=0
    #allocation3 [shape = 'u8[65536]{0}', space=vmem, size = 0x10000, scoped, tag = 'input window, operand 2, single buffered']
    #allocation4 [shape = 's32[2]{0}', space=sflag, size = 0x8, scoped, tag = 'scoped memory for gnn_forward.5']
    #allocation5 [shape = 'u8[512]{0}', space=vmem, size = 0x400, scoped, tag = 'input window, operand 3, single buffered']
    #allocation6 [shape = 's32[1]{0}', space=sflag, size = 0x4, scoped, tag = 'scoped memory for gnn_forward.5']
    %9 = vsyncpa [#allocation4], 0
    %10 = vsyncpa [#allocation6], 0
    loop: start=0, step=1, limit=4
    $region2: #{gnn_forward.5} parent=1 // loop_pre_header
      _
    $region3: #{gnn_forward.5} parent=1 // loop_header
      %s12 = sphi 0, %s16
      %p13 = scmp.ge.s32.totalorder %s12, 4
      %s19 = sphi 0, %s31
      %s20 = sphi 0, %s27
      %s21 = sphi 0, %s19
      %s22 = sphi 0, %s20
      %s23 = sphi 0, %s21
      %s24 = sphi 0, %s22
      %s36 = sphi 0, %s38
      %s39 = sphi 0, %s36
      %s40 = sphi 0, %s39
      %s56 = sphi 0, %s40
      %s60 = sphi 0, %s60
      %s62 = sphi 0, %s60
      %s63 = sphi 0, %s62
      %s77 = sphi 0, %s63
      %s81 = sphi 0, %s81
      %s83 = sphi 0, %s81
      %s84 = sphi 0, %s83
      %s98 = sphi 0, %s84
      %s102 = sphi 0, %s102
      %s104 = sphi 0, %s102
      %s105 = sphi 0, %s104
      %s119 = sphi 0, %s105
      %s125 = sphi 0, %s127
      %s128 = sphi 0, %s125
      %s129 = sphi 0, %s128
      %s145 = sphi 0, %s129
    $region4: #{gnn_forward.5} parent=1 // loop_header_branch
      %15 = sbr.rel (%p13) target = $region8
    $region5: #{gnn_forward.5} parent=1 // loop_body
      %s17 = ssub.s32 %s12, 1
      %s18 = ssub.s32 %s12, 2
      %s25 = sadd.s32 1, %s20
      %p26 = scmp.ge.s32.totalorder %s25, 1
      %s27 = scalar_select %p26, 0, %s25
      %s28 = sadd.s32 1, %s19
      %s29 = scalar_select %p26, %s28, %s19
      %p30 = scmp.ge.s32.totalorder %s29, 2
      %s31 = scalar_select %p30, 0, %s29
      %s32 = ssub.s32 %s19, %s31
      %s33 = ssub.s32 %s20, %s27
      %s34 = sor.u32 %s32, %s33
      %p35 = scmp.eq.s32.totalorder %s34, 0
      %s37 = sadd.s32 %s36, 1
      %s38 = scalar_select %p35, %s36, %s37
      %p41 = pneg %p35
      %p42 = scmp.eq.s32.totalorder %s12, 1
      %p43 = por %p41, %p42
      %p44 = scmp.ne.s32.totalorder %s36, %s39
      %p45 = scmp.eq.s32.totalorder %s12, 0
      %p46 = por %p44, %p45
      %p47 = scmp.ne.s32.totalorder %s36, %s39
      %p48 = scmp.eq.s32.totalorder %s17, 1
      %p49 = por %p47, %p48
      %p50 = scmp.ne.s32.totalorder %s39, %s40
      %p51 = scmp.eq.s32.totalorder %s17, 0
      %p52 = por %p50, %p51
      %p53 = scmp.ne.s32.totalorder %s39, %s40
      %p54 = scmp.eq.s32.totalorder %s18, 1
      %p55 = por %p53, %p54
      %p57 = scmp.ne.s32.totalorder %s40, %s56
      %p58 = scmp.eq.s32.totalorder %s18, 0
      %p59 = por %p57, %p58
      %s61 = sadd.s32 %s60, 1
      %p64 = scmp.eq.s32.totalorder %s12, 1
      %p65 = scmp.ne.s32.totalorder %s60, %s62
      %p66 = scmp.eq.s32.totalorder %s12, 0
      %p67 = por %p65, %p66
      %p68 = scmp.ne.s32.totalorder %s60, %s62
      %p69 = scmp.eq.s32.totalorder %s17, 1
      %p70 = por %p68, %p69
      %p71 = scmp.ne.s32.totalorder %s62, %s63
      %p72 = scmp.eq.s32.totalorder %s17, 0
      %p73 = por %p71, %p72
      %p74 = scmp.ne.s32.totalorder %s62, %s63
      %p75 = scmp.eq.s32.totalorder %s18, 1
      %p76 = por %p74, %p75
      %p78 = scmp.ne.s32.totalorder %s63, %s77
      %p79 = scmp.eq.s32.totalorder %s18, 0
      %p80 = por %p78, %p79
      %s82 = sadd.s32 %s81, 1
      %p85 = scmp.eq.s32.totalorder %s12, 1
      %p86 = scmp.ne.s32.totalorder %s81, %s83
      %p87 = scmp.eq.s32.totalorder %s12, 0
      %p88 = por %p86, %p87
      %p89 = scmp.ne.s32.totalorder %s81, %s83
      %p90 = scmp.eq.s32.totalorder %s17, 1
      %p91 = por %p89, %p90
      %p92 = scmp.ne.s32.totalorder %s83, %s84
      %p93 = scmp.eq.s32.totalorder %s17, 0
      %p94 = por %p92, %p93
      %p95 = scmp.ne.s32.totalorder %s83, %s84
      %p96 = scmp.eq.s32.totalorder %s18, 1
      %p97 = por %p95, %p96
      %p99 = scmp.ne.s32.totalorder %s84, %s98
      %p100 = scmp.eq.s32.totalorder %s18, 0
      %p101 = por %p99, %p100
      %s103 = sadd.s32 %s102, 1
      %p106 = scmp.eq.s32.totalorder %s12, 1
      %p107 = scmp.ne.s32.totalorder %s102, %s104
      %p108 = scmp.eq.s32.totalorder %s12, 0
      %p109 = por %p107, %p108
      %p110 = scmp.ne.s32.totalorder %s102, %s104
      %p111 = scmp.eq.s32.totalorder %s17, 1
      %p112 = por %p110, %p111
      %p113 = scmp.ne.s32.totalorder %s104, %s105
      %p114 = scmp.eq.s32.totalorder %s17, 0
      %p115 = por %p113, %p114
      %p116 = scmp.ne.s32.totalorder %s104, %s105
      %p117 = scmp.eq.s32.totalorder %s18, 1
      %p118 = por %p116, %p117
      %p120 = scmp.ne.s32.totalorder %s105, %s119
      %p121 = scmp.eq.s32.totalorder %s18, 0
      %p122 = por %p120, %p121
      %s123 = ssub.s32 %s19, %s31
      %p124 = scmp.eq.s32.totalorder %s123, 0
      %s126 = sadd.s32 %s125, 1
      %s127 = scalar_select %p124, %s125, %s126
      %p130 = pneg %p124
      %p131 = scmp.eq.s32.totalorder %s12, 1
      %p132 = por %p130, %p131
      %p133 = scmp.ne.s32.totalorder %s125, %s128
      %p134 = scmp.eq.s32.totalorder %s12, 0
      %p135 = por %p133, %p134
      %p136 = scmp.ne.s32.totalorder %s125, %s128
      %p137 = scmp.eq.s32.totalorder %s17, 1
      %p138 = por %p136, %p137
      %p139 = scmp.ne.s32.totalorder %s128, %s129
      %p140 = scmp.eq.s32.totalorder %s17, 0
      %p141 = por %p139, %p140
      %p142 = scmp.ne.s32.totalorder %s128, %s129
      %p143 = scmp.eq.s32.totalorder %s18, 1
      %p144 = por %p142, %p143
      %p146 = scmp.ne.s32.totalorder %s129, %s145
      %p147 = scmp.eq.s32.totalorder %s18, 0
      %p148 = por %p146, %p147
      %p149 = scmp.le.s32.totalorder 1, %s12
      %p150 = scmp.lt.s32.totalorder %s12, 3
      %p151 = pnand %p149, %p150
      %p152 = pneg %p151
      // Predicated region
      $region9: #{gnn_forward.5} parent=5 // pred_check
        _
      $region10: #{gnn_forward.5} parent=5 // pred_check_branch
        %154 = sbr.rel (%p151) target = $region12
      $region11: #{gnn_forward.5} parent=5 // pred_region
        %s155 = ssub.s32 %s12, 1
        // Predicated region
        $region13: #{gnn_forward.5} parent=11 // pred_check
          %p156 = pneg %p73
        $region14: #{gnn_forward.5} parent=11 // pred_check_branch
          %158 = sbr.rel (%p156) target = $region16
        $region15: #{gnn_forward.5} parent=11 // pred_region
          _
        $region16: #{gnn_forward.5} parent=11 // pred_fallthru
          _
        // Predicated region
        $region17: #{gnn_forward.5} parent=11 // pred_check
          %p159 = pneg %p94
        $region18: #{gnn_forward.5} parent=11 // pred_check_branch
          %161 = sbr.rel (%p159) target = $region20
        $region19: #{gnn_forward.5} parent=11 // pred_region
          %163 = vsyncadd [#allocation4], 0
          %s164 = sshll.u32 %s2, 4
          %s165 = int_to_ptr.hbm [resolvable:$true] %s164
          %s166 = sshll.u32 [#allocation3], 4
          %s167 = int_to_ptr.vmem [resolvable:$true] %s166
          %172 = dma.hbm_to_vmem [thread:$0]  %s165, 2048, %s167, [#allocation4], 128, 128, 8
        $region20: #{gnn_forward.5} parent=11 // pred_fallthru
          _
        // Predicated region
        $region21: #{gnn_forward.5} parent=11 // pred_check
          %p173 = pneg %p115
        $region22: #{gnn_forward.5} parent=11 // pred_check_branch
          %175 = sbr.rel (%p173) target = $region24
        $region23: #{gnn_forward.5} parent=11 // pred_region
          %177 = vsyncadd [#allocation6], 0
          %s179 = sshll.u32 %s3, 4
          %s180 = int_to_ptr.hbm [resolvable:$true] %s179
          %s181 = sshll.u32 [#allocation5], 4
          %s182 = int_to_ptr.vmem [resolvable:$true] %s181
          %184 = dma.hbm_to_vmem [thread:$0]  %s180, 16, %s182, [#allocation6]
        $region24: #{gnn_forward.5} parent=11 // pred_fallthru
          _
      $region12: #{gnn_forward.5} parent=5 // pred_fallthru
        _
      %p185 = scmp.lt.s32.totalorder %s12, 2
      // Predicated region
      $region25: #{gnn_forward.5} parent=5 // pred_check
        %p186 = pneg %p185
      $region26: #{gnn_forward.5} parent=5 // pred_check_branch
        %188 = sbr.rel (%p186) target = $region28
      $region27: #{gnn_forward.5} parent=5 // pred_region
        // Predicated region
        $region29: #{gnn_forward.5} parent=27 // pred_check
          %p189 = pneg %p46
        $region30: #{gnn_forward.5} parent=27 // pred_check_branch
          %191 = sbr.rel (%p189) target = $region32
        $region31: #{gnn_forward.5} parent=27 // pred_region
          %s192 = smul.u32 2, %s19
          %p193 = scmp.lt.s32.totalorder %s192, 3
          %s194 = scalar_select %p193, %s192, 3
          %p195 = scmp.lt.s32.totalorder %s20, 0
          %s196 = scalar_select %p195, %s20, 0
          %s197 = sadd.s32 %s196, %s194
          %s198 = smul.addr %s197, 8
          %s199 = scalar_lea.vmem %s0, %s198
          %s200 = smul.u32 2, %s19
        $region32: #{gnn_forward.5} parent=27 // pred_fallthru
          _
      $region28: #{gnn_forward.5} parent=5 // pred_fallthru
        _
      %p201 = scmp.le.s32.totalorder 1, %s12
      %p202 = scmp.lt.s32.totalorder %s12, 3
      %p203 = pnand %p201, %p202
      %p204 = pneg %p203
      // Predicated region
      $region33: #{gnn_forward.5} parent=5 // pred_check
        _
      $region34: #{gnn_forward.5} parent=5 // pred_check_branch
        %206 = sbr.rel (%p203) target = $region36
      $region35: #{gnn_forward.5} parent=5 // pred_region
        %s207 = ssub.s32 %s12, 1
        // Predicated region
        $region37: #{gnn_forward.5} parent=35 // pred_check
          %p208 = pneg %p94
        $region38: #{gnn_forward.5} parent=35 // pred_check_branch
          %210 = sbr.rel (%p208) target = $region40
        $region39: #{gnn_forward.5} parent=35 // pred_region
          %212 = dma.done [#allocation4], 2048
        $region40: #{gnn_forward.5} parent=35 // pred_fallthru
          _
        // Predicated region
        $region41: #{gnn_forward.5} parent=35 // pred_check
          %p213 = pneg %p115
        $region42: #{gnn_forward.5} parent=35 // pred_check_branch
          %215 = sbr.rel (%p213) target = $region44
        $region43: #{gnn_forward.5} parent=35 // pred_region
          %217 = dma.done [#allocation6], 16
        $region44: #{gnn_forward.5} parent=35 // pred_fallthru
          _
        %s218 = smul.u32 2, %s21
        %p219 = scmp.lt.s32.totalorder %s218, 3
        %s220 = scalar_select %p219, %s218, 3
        %p221 = scmp.lt.s32.totalorder %s22, 0
        %s222 = scalar_select %p221, %s22, 0
        %s223 = sadd.s32 %s222, %s220
        %s224 = smul.addr %s223, 8
        %s225 = scalar_lea.vmem %s0, %s224
        %p226 = pneg %p52
        %p227 = pneg %p49
        %p228 = pneg %p73
        %p229 = pneg %p70
        %p230 = pneg %p94
        %p231 = pneg %p91
        %p232 = pneg %p115
        %p233 = pneg %p112
        %p234 = pneg %p141
        %p235 = pneg %p138
        %s236 = smul.u32 2, %s21
        %p237 = scmp.lt.s32.totalorder %s236, 3
        %s238 = scalar_select %p237, %s236, 3
        %s239 = smul.addr %s238, 8
        %s240 = scalar_lea.vmem %s4, %s239
        %s241 = smul.u32 2, %s21
        %p242 = scmp.lt.s32.totalorder %s241, 3
        %s243 = scalar_select %p242, %s241, 3
        %p244 = scmp.lt.s32.totalorder %s22, 0
        %s245 = scalar_select %p244, %s22, 0
        %s246 = sadd.s32 %s245, %s243
        %s247 = smul.addr %s246, 8
        %s248 = scalar_lea.vmem %s0, %s247
        %s249 = smul.u32 2, %s21
        %s250 = smul.u32 2, %s21
        %p251 = scmp.lt.s32.totalorder %s250, 3
        %s252 = scalar_select %p251, %s250, 3
        %s253 = smul.addr %s252, 8
        %s254 = scalar_lea.vmem %s4, %s253
        %s255 = smul.u32 2, %s21
        %p256 = scmp.eq.s32.totalorder %s22, 0
        // Predicated region
        $region45: #{gnn_forward.5} parent=35 // pred_check
          %p257 = pneg %p256
        $region46: #{gnn_forward.5} parent=35 // pred_check_branch
          %259 = sbr.rel (%p257) target = $region48
        $region47: #{gnn_forward.5} parent=35 // pred_region
          %260 = vst [vmem:[#allocation2] sm:$0xff] 0.0
          %261 = vst [vmem:[#allocation2 + $0x8] sm:$0xff] 0.0
        $region48: #{gnn_forward.5} parent=35 // pred_fallthru
          _
        %s262 = smul.u32 %s22, 32
        %s263 = scalar_lea.vmem %s1, %s262
        %v264 = vld [vmem:[%s263] sm:$0xff]
        %v265 = vld [vmem:[%s263 + $0x8] sm:$0xff]
        %v266 = vld [vmem:[%s263 + $0x10] sm:$0xff]
        %v267 = vld [vmem:[%s263 + $0x18] sm:$0xff]
        %v268 = vld [vmem:[#allocation2] sm:$0xff]
        %v269 = vld [vmem:[#allocation2 + $0x8] sm:$0xff]
        %v270 = vld [vmem:[%s248] sm:$0xff]
        %v271 = vld [vmem:[%s248 + $0x8] sm:$0xff]
        %vm272 = vcmask 261120
        %v274 = vsel %vm272, %v270, 0
        %v277 = vsel %vm272, %v271, 0
        %279 = vmatpush.msra.mxu0 0.0
        %280 = vmatpush.msra.mxu0 0.0
        %281 = vmatpush.msra.mxu0 0.0
        %282 = vmatpush.msra.mxu0 0.0
        %283 = vmatpush.msra.mxu0 0.0
        %284 = vmatpush.msra.mxu0 0.0
        %285 = vmatpush.msra.mxu0 0.0
        %286 = vmatpush.msra.mxu0 0.0
        %287 = vmatpush.msra.mxu0 0.0
        %288 = vmatpush.msra.mxu0 0.0
        %289 = vmatpush.msra.mxu0 0.0
        %290 = vmatpush.msra.mxu0 0.0
        %291 = vmatpush.msra.mxu0 %v267
        %292 = vmatpush.msra.mxu0 %v266
        %293 = vmatpush.msra.mxu0 %v265
        %294 = vmatpush.msra.mxu0 %v264
        %295 = vmatmul.f32.gmra.mxu0 %v274
        %v296 = vpop.f32.mrf.mxu0
        %v297 = vadd.f32 0.0, %v296
        %298 = vmatmul.f32.gmra.mxu0 %v277
        %v299 = vpop.f32.mrf.mxu0
        %v300 = vadd.f32 0.0, %v299
        %301 = vdwg.mxu0
        %v302 = vadd.f32 %v268, %v297
        %v303 = vadd.f32 %v269, %v300
        %304 = vst [vmem:[#allocation2] sm:$0xff] %v302
        %305 = vst [vmem:[#allocation2 + $0x8] sm:$0xff] %v303
        // Predicated region
        $region49: #{gnn_forward.5} parent=35 // pred_check
          %p306 = pneg %p256
        $region50: #{gnn_forward.5} parent=35 // pred_check_branch
          %308 = sbr.rel (%p306) target = $region52
        $region51: #{gnn_forward.5} parent=35 // pred_region
          %v309 = vld [vmem:[#allocation2] sm:$0xff]
          %v310 = vld [vmem:[#allocation2 + $0x8] sm:$0xff]
          %v311 = vld [vmem:[#allocation3] sm:$0xff]
          %v312 = vld [vmem:[#allocation3 + $0x8] sm:$0xff]
          %v313 = vld [vmem:[#allocation3 + $0x10] sm:$0xff]
          %v314 = vld [vmem:[#allocation3 + $0x18] sm:$0xff]
          %v315 = vld [vmem:[#allocation3 + $0x20] sm:$0xff]
          %v316 = vld [vmem:[#allocation3 + $0x28] sm:$0xff]
          %v317 = vld [vmem:[#allocation3 + $0x30] sm:$0xff]
          %v318 = vld [vmem:[#allocation3 + $0x38] sm:$0xff]
          %v319 = vld [vmem:[#allocation3 + $0x40] sm:$0xff]
          %v320 = vld [vmem:[#allocation3 + $0x48] sm:$0xff]
          %v321 = vld [vmem:[#allocation3 + $0x50] sm:$0xff]
          %v322 = vld [vmem:[#allocation3 + $0x58] sm:$0xff]
          %v323 = vld [vmem:[#allocation3 + $0x60] sm:$0xff]
          %v324 = vld [vmem:[#allocation3 + $0x68] sm:$0xff]
          %v325 = vld [vmem:[#allocation3 + $0x70] sm:$0xff]
          %v326 = vld [vmem:[#allocation3 + $0x78] sm:$0xff]
          %v327 = vld [vmem:[#allocation5] sm:$0x1]
          %v329 = vperm.slane %v327, 0
          %331 = vmatpush.msra.mxu0 %v326
          %332 = vmatpush.msra.mxu0 %v325
          %333 = vmatpush.msra.mxu0 %v324
          %334 = vmatpush.msra.mxu0 %v323
          %335 = vmatpush.msra.mxu0 %v322
          %336 = vmatpush.msra.mxu0 %v321
          %337 = vmatpush.msra.mxu0 %v320
          %338 = vmatpush.msra.mxu0 %v319
          %339 = vmatpush.msra.mxu0 %v318
          %340 = vmatpush.msra.mxu0 %v317
          %341 = vmatpush.msra.mxu0 %v316
          %342 = vmatpush.msra.mxu0 %v315
          %343 = vmatpush.msra.mxu0 %v314
          %344 = vmatpush.msra.mxu0 %v313
          %345 = vmatpush.msra.mxu0 %v312
          %346 = vmatpush.msra.mxu0 %v311
          %347 = vmatmul.f32.gmra.mxu0 %v309
          %v348 = vpop.f32.mrf.mxu0
          %v349 = vadd.f32 %v329, %v348
          %350 = vmatmul.f32.gmra.mxu0 %v310
          %v351 = vpop.f32.mrf.mxu0
          %v352 = vadd.f32 %v329, %v351
          %353 = vdwg.mxu0
          %v354 = vmax.f32 %v349, 0.0
          %v355 = vmax.f32 %v352, 0.0
          %356 = vst [vmem:[%s254] sm:$0xff] %v354
          %357 = vst [vmem:[%s254 + $0x8] sm:$0xff] %v355
        $region52: #{gnn_forward.5} parent=35 // pred_fallthru
          _
        %s358 = smul.u32 2, %s21
        %p359 = scmp.lt.s32.totalorder %s358, 3
        %s360 = scalar_select %p359, %s358, 3
        %s361 = smul.addr %s360, 8
        %s362 = scalar_lea.vmem %s4, %s361
        // Predicated region
        $region53: #{gnn_forward.5} parent=35 // pred_check
          %p363 = pneg %p138
        $region54: #{gnn_forward.5} parent=35 // pred_check_branch
          %365 = sbr.rel (%p363) target = $region56
        $region55: #{gnn_forward.5} parent=35 // pred_region
          %s366 = smul.u32 2, %s21
        $region56: #{gnn_forward.5} parent=35 // pred_fallthru
          _
      $region36: #{gnn_forward.5} parent=5 // pred_fallthru
        _
      %p367 = scmp.le.s32.totalorder 2, %s12
      // Predicated region
      $region57: #{gnn_forward.5} parent=5 // pred_check
        %p368 = pneg %p367
      $region58: #{gnn_forward.5} parent=5 // pred_check_branch
        %370 = sbr.rel (%p368) target = $region60
      $region59: #{gnn_forward.5} parent=5 // pred_region
        %s371 = ssub.s32 %s12, 2
        // Predicated region
        $region61: #{gnn_forward.5} parent=59 // pred_check
          %p372 = pneg %p144
        $region62: #{gnn_forward.5} parent=59 // pred_check_branch
          %374 = sbr.rel (%p372) target = $region64
        $region63: #{gnn_forward.5} parent=59 // pred_region
          %s375 = smul.u32 2, %s23
          %p376 = scmp.lt.s32.totalorder %s375, 3
          %s377 = scalar_select %p376, %s375, 3
          %s378 = smul.addr %s377, 8
          %s379 = scalar_lea.vmem %s4, %s378
        $region64: #{gnn_forward.5} parent=59 // pred_fallthru
          _
      $region60: #{gnn_forward.5} parent=5 // pred_fallthru
        _
    $region6: #{gnn_forward.5} parent=1 // loop_footer
      %s16 = sadd.s32 1, %s12
    $region7: #{gnn_forward.5} parent=1 // loop_footer_branch
      %11 = sbr.rel target = $region3
    $region8: #{gnn_forward.5} parent=1 // loop_exit
      _
    %380 = vsyncpa [#allocation4], 1
    %s381 = scalar_lea.sflag [#allocation4], 1
    %382 = vsyncpa %s381, 1
    %383 = vsyncpa [#allocation6], 1

// kernel: gnn_forward.7
$region0: #{gnn_forward.7}
  #allocation0 [shape = 'u32[]', space=smem, size = 0x4, offset = 0x4, fixed_abs, tag = 'smem constant byte address 0x4 - core index']
  #allocation1 [shape = 'u32[72,128]{1,0:T(1,128)}', space=vmem, size = 0x9000, scoped, tag = 'internal scratch']
  %s0 = inlined_call_operand.vmem [shape: f32[4,1024], index: 0, kind: input, shape index: {}]
  %s1 = inlined_call_operand.vmem [shape: f32[1024,32], index: 1, kind: input, shape index: {}]
  %s2 = inlined_call_operand.vmem [shape: f32[1,32], index: 2, kind: input, shape index: {}]
  %s3 = inlined_call_operand.vmem [shape: f32[32,32], index: 3, kind: input, shape index: {}]
  %s4 = inlined_call_operand.vmem [shape: f32[1,32], index: 4, kind: input, shape index: {}]
  %s5 = inlined_call_operand.vmem [shape: f32[32,128], index: 5, kind: input, shape index: {}]
  %s6 = inlined_call_operand.vmem [shape: f32[1,128], index: 6, kind: input, shape index: {}]
  %s7 = inlined_call_operand.vmem [shape: f32[4,128], index: 7, kind: output, shape index: {}]
  %s8 = sld [smem:[#allocation0]]
  $region38: #{gnn_forward.7} parent=0
    _
  %s10 = ssub.s32 1, %s8
  %s11 = scalar_select 0, %s10, %s8
  // Predicated region
  $region2: #{gnn_forward.7} parent=0 // pred_check
    _
  $region3: #{gnn_forward.7} parent=0 // pred_check_branch
    %13 = sbr.rel (0) target = $region5
  $region4: #{gnn_forward.7} parent=0 // pred_region
    _
  $region5: #{gnn_forward.7} parent=0 // pred_fallthru
    _
  // Predicated region
  $region6: #{gnn_forward.7} parent=0 // pred_check
    _
  $region7: #{gnn_forward.7} parent=0 // pred_check_branch
    %15 = sbr.rel (0) target = $region9
  $region8: #{gnn_forward.7} parent=0 // pred_region
    _
  $region9: #{gnn_forward.7} parent=0 // pred_fallthru
    _
  // Predicated region
  $region10: #{gnn_forward.7} parent=0 // pred_check
    _
  $region11: #{gnn_forward.7} parent=0 // pred_check_branch
    %17 = sbr.rel (0) target = $region13
  $region12: #{gnn_forward.7} parent=0 // pred_region
    _
  $region13: #{gnn_forward.7} parent=0 // pred_fallthru
    _
  // Predicated region
  $region14: #{gnn_forward.7} parent=0 // pred_check
    _
  $region15: #{gnn_forward.7} parent=0 // pred_check_branch
    %19 = sbr.rel (0) target = $region17
  $region16: #{gnn_forward.7} parent=0 // pred_region
    _
  $region17: #{gnn_forward.7} parent=0 // pred_fallthru
    _
  // Predicated region
  $region18: #{gnn_forward.7} parent=0 // pred_check
    _
  $region19: #{gnn_forward.7} parent=0 // pred_check_branch
    %21 = sbr.rel (0) target = $region21
  $region20: #{gnn_forward.7} parent=0 // pred_region
    _
  $region21: #{gnn_forward.7} parent=0 // pred_fallthru
    _
  // Predicated region
  $region22: #{gnn_forward.7} parent=0 // pred_check
    _
  $region23: #{gnn_forward.7} parent=0 // pred_check_branch
    %23 = sbr.rel (0) target = $region25
  $region24: #{gnn_forward.7} parent=0 // pred_region
    _
  $region25: #{gnn_forward.7} parent=0 // pred_fallthru
    _
  // Predicated region
  $region26: #{gnn_forward.7} parent=0 // pred_check
    _
  $region27: #{gnn_forward.7} parent=0 // pred_check_branch
    %25 = sbr.rel (0) target = $region29
  $region28: #{gnn_forward.7} parent=0 // pred_region
    _
  $region29: #{gnn_forward.7} parent=0 // pred_fallthru
    _
  %v26 = vld [vmem:[%s0] sm:$0xff]
  %v27 = vld [vmem:[%s0 + $0x8] sm:$0xff]
  %v28 = vld [vmem:[%s0 + $0x10] sm:$0xff]
  %v29 = vld [vmem:[%s0 + $0x18] sm:$0xff]
  %v30 = vld [vmem:[%s1] sm:$0xff]
  %v31 = vld [vmem:[%s1 + $0x8] sm:$0xff]
  %v32 = vld [vmem:[%s1 + $0x10] sm:$0xff]
  %v33 = vld [vmem:[%s1 + $0x18] sm:$0xff]
  %v34 = vld [vmem:[%s1 + $0x20] sm:$0xff]
  %v35 = vld [vmem:[%s1 + $0x28] sm:$0xff]
  %v36 = vld [vmem:[%s1 + $0x30] sm:$0xff]
  %v37 = vld [vmem:[%s1 + $0x38] sm:$0xff]
  %v38 = vld [vmem:[%s1 + $0x40] sm:$0xff]
  %v39 = vld [vmem:[%s1 + $0x48] sm:$0xff]
  %v40 = vld [vmem:[%s1 + $0x50] sm:$0xff]
  %v41 = vld [vmem:[%s1 + $0x58] sm:$0xff]
  %v42 = vld [vmem:[%s1 + $0x60] sm:$0xff]
  %v43 = vld [vmem:[%s1 + $0x68] sm:$0xff]
  %v44 = vld [vmem:[%s1 + $0x70] sm:$0xff]
  %v45 = vld [vmem:[%s1 + $0x78] sm:$0xff]
  %v46 = vld [vmem:[%s1 + $0x80] sm:$0xff]
  %v47 = vld [vmem:[%s1 + $0x88] sm:$0xff]
  %v48 = vld [vmem:[%s1 + $0x90] sm:$0xff]
  %v49 = vld [vmem:[%s1 + $0x98] sm:$0xff]
  %v50 = vld [vmem:[%s1 + $0xa0] sm:$0xff]
  %v51 = vld [vmem:[%s1 + $0xa8] sm:$0xff]
  %v52 = vld [vmem:[%s1 + $0xb0] sm:$0xff]
  %v53 = vld [vmem:[%s1 + $0xb8] sm:$0xff]
  %v54 = vld [vmem:[%s1 + $0xc0] sm:$0xff]
  %v55 = vld [vmem:[%s1 + $0xc8] sm:$0xff]
  %v56 = vld [vmem:[%s1 + $0xd0] sm:$0xff]
  %v57 = vld [vmem:[%s1 + $0xd8] sm:$0xff]
  %v58 = vld [vmem:[%s1 + $0xe0] sm:$0xff]
  %v59 = vld [vmem:[%s1 + $0xe8] sm:$0xff]
  %v60 = vld [vmem:[%s1 + $0xf0] sm:$0xff]
  %v61 = vld [vmem:[%s1 + $0xf8] sm:$0xff]
  %v62 = vld [vmem:[%s1 + $0x100] sm:$0xff]
  %v63 = vld [vmem:[%s1 + $0x108] sm:$0xff]
  %v64 = vld [vmem:[%s1 + $0x110] sm:$0xff]
  %v65 = vld [vmem:[%s1 + $0x118] sm:$0xff]
  %v66 = vld [vmem:[%s1 + $0x120] sm:$0xff]
  %v67 = vld [vmem:[%s1 + $0x128] sm:$0xff]
  %v68 = vld [vmem:[%s1 + $0x130] sm:$0xff]
  %v69 = vld [vmem:[%s1 + $0x138] sm:$0xff]
  %v70 = vld [vmem:[%s1 + $0x140] sm:$0xff]
  %v71 = vld [vmem:[%s1 + $0x148] sm:$0xff]
  %v72 = vld [vmem:[%s1 + $0x150] sm:$0xff]
  %v73 = vld [vmem:[%s1 + $0x158] sm:$0xff]
  %v74 = vld [vmem:[%s1 + $0x160] sm:$0xff]
  %v75 = vld [vmem:[%s1 + $0x168] sm:$0xff]
  %v76 = vld [vmem:[%s1 + $0x170] sm:$0xff]
  %v77 = vld [vmem:[%s1 + $0x178] sm:$0xff]
  %v78 = vld [vmem:[%s1 + $0x180] sm:$0xff]
  %v79 = vld [vmem:[%s1 + $0x188] sm:$0xff]
  %v80 = vld [vmem:[%s1 + $0x190] sm:$0xff]
  %v81 = vld [vmem:[%s1 + $0x198] sm:$0xff]
  %v82 = vld [vmem:[%s1 + $0x1a0] sm:$0xff]
  %v83 = vld [vmem:[%s1 + $0x1a8] sm:$0xff]
  %v84 = vld [vmem:[%s1 + $0x1b0] sm:$0xff]
  %v85 = vld [vmem:[%s1 + $0x1b8] sm:$0xff]
  %v86 = vld [vmem:[%s1 + $0x1c0] sm:$0xff]
  %v87 = vld [vmem:[%s1 + $0x1c8] sm:$0xff]
  %v88 = vld [vmem:[%s1 + $0x1d0] sm:$0xff]
  %v89 = vld [vmem:[%s1 + $0x1d8] sm:$0xff]
  %v90 = vld [vmem:[%s1 + $0x1e0] sm:$0xff]
  %v91 = vld [vmem:[%s1 + $0x1e8] sm:$0xff]
  %v92 = vld [vmem:[%s1 + $0x1f0] sm:$0xff]
  %v93 = vld [vmem:[%s1 + $0x1f8] sm:$0xff]
  %v94 = vld [vmem:[%s1 + $0x200] sm:$0xff]
  %v95 = vld [vmem:[%s1 + $0x208] sm:$0xff]
  %v96 = vld [vmem:[%s1 + $0x210] sm:$0xff]
  %v97 = vld [vmem:[%s1 + $0x218] sm:$0xff]
  %v98 = vld [vmem:[%s1 + $0x220] sm:$0xff]
  %v99 = vld [vmem:[%s1 + $0x228] sm:$0xff]
  %v100 = vld [vmem:[%s1 + $0x230] sm:$0xff]
  %v101 = vld [vmem:[%s1 + $0x238] sm:$0xff]
  %v102 = vld [vmem:[%s1 + $0x240] sm:$0xff]
  %v103 = vld [vmem:[%s1 + $0x248] sm:$0xff]
  %v104 = vld [vmem:[%s1 + $0x250] sm:$0xff]
  %v105 = vld [vmem:[%s1 + $0x258] sm:$0xff]
  %v106 = vld [vmem:[%s1 + $0x260] sm:$0xff]
  %v107 = vld [vmem:[%s1 + $0x268] sm:$0xff]
  %v108 = vld [vmem:[%s1 + $0x270] sm:$0xff]
  %v109 = vld [vmem:[%s1 + $0x278] sm:$0xff]
  %v110 = vld [vmem:[%s1 + $0x280] sm:$0xff]
  %v111 = vld [vmem:[%s1 + $0x288] sm:$0xff]
  %v112 = vld [vmem:[%s1 + $0x290] sm:$0xff]
  %v113 = vld [vmem:[%s1 + $0x298] sm:$0xff]
  %v114 = vld [vmem:[%s1 + $0x2a0] sm:$0xff]
  %v115 = vld [vmem:[%s1 + $0x2a8] sm:$0xff]
  %v116 = vld [vmem:[%s1 + $0x2b0] sm:$0xff]
  %v117 = vld [vmem:[%s1 + $0x2b8] sm:$0xff]
  %v118 = vld [vmem:[%s1 + $0x2c0] sm:$0xff]
  %v119 = vld [vmem:[%s1 + $0x2c8] sm:$0xff]
  %v120 = vld [vmem:[%s1 + $0x2d0] sm:$0xff]
  %v121 = vld [vmem:[%s1 + $0x2d8] sm:$0xff]
  %v122 = vld [vmem:[%s1 + $0x2e0] sm:$0xff]
  %v123 = vld [vmem:[%s1 + $0x2e8] sm:$0xff]
  %v124 = vld [vmem:[%s1 + $0x2f0] sm:$0xff]
  %v125 = vld [vmem:[%s1 + $0x2f8] sm:$0xff]
  %v126 = vld [vmem:[%s1 + $0x300] sm:$0xff]
  %v127 = vld [vmem:[%s1 + $0x308] sm:$0xff]
  %v128 = vld [vmem:[%s1 + $0x310] sm:$0xff]
  %v129 = vld [vmem:[%s1 + $0x318] sm:$0xff]
  %v130 = vld [vmem:[%s1 + $0x320] sm:$0xff]
  %v131 = vld [vmem:[%s1 + $0x328] sm:$0xff]
  %v132 = vld [vmem:[%s1 + $0x330] sm:$0xff]
  %v133 = vld [vmem:[%s1 + $0x338] sm:$0xff]
  %v134 = vld [vmem:[%s1 + $0x340] sm:$0xff]
  %v135 = vld [vmem:[%s1 + $0x348] sm:$0xff]
  %v136 = vld [vmem:[%s1 + $0x350] sm:$0xff]
  %v137 = vld [vmem:[%s1 + $0x358] sm:$0xff]
  %v138 = vld [vmem:[%s1 + $0x360] sm:$0xff]
  %v139 = vld [vmem:[%s1 + $0x368] sm:$0xff]
  %v140 = vld [vmem:[%s1 + $0x370] sm:$0xff]
  %v141 = vld [vmem:[%s1 + $0x378] sm:$0xff]
  %v142 = vld [vmem:[%s1 + $0x380] sm:$0xff]
  %v143 = vld [vmem:[%s1 + $0x388] sm:$0xff]
  %v144 = vld [vmem:[%s1 + $0x390] sm:$0xff]
  %v145 = vld [vmem:[%s1 + $0x398] sm:$0xff]
  %v146 = vld [vmem:[%s1 + $0x3a0] sm:$0xff]
  %v147 = vld [vmem:[%s1 + $0x3a8] sm:$0xff]
  %v148 = vld [vmem:[%s1 + $0x3b0] sm:$0xff]
  %v149 = vld [vmem:[%s1 + $0x3b8] sm:$0xff]
  %v150 = vld [vmem:[%s1 + $0x3c0] sm:$0xff]
  %v151 = vld [vmem:[%s1 + $0x3c8] sm:$0xff]
  %v152 = vld [vmem:[%s1 + $0x3d0] sm:$0xff]
  %v153 = vld [vmem:[%s1 + $0x3d8] sm:$0xff]
  %v154 = vld [vmem:[%s1 + $0x3e0] sm:$0xff]
  %v155 = vld [vmem:[%s1 + $0x3e8] sm:$0xff]
  %v156 = vld [vmem:[%s1 + $0x3f0] sm:$0xff]
  %v157 = vld [vmem:[%s1 + $0x3f8] sm:$0xff]
  %v158 = vld [vmem:[%s2] sm:$0x1]
  %v160 = vperm.slane %v158, 0
  %166 = vst [vmem:[#allocation1] ss:$2 sm:$0xff] %v26
  %s167 = scalar_lea.vmem [#allocation1], 16
  %168 = vst [vmem:[%s167] ss:$2 sm:$0xff] %v27
  %s169 = scalar_lea.vmem [#allocation1], 32
  %170 = vst [vmem:[%s169] ss:$2 sm:$0xff] %v28
  %s171 = scalar_lea.vmem [#allocation1], 48
  %172 = vst [vmem:[%s171] ss:$2 sm:$0xff] %v29
  %v173 = vld.sshfl [vmem:[#allocation1] sm:$0xff pattern:$0x75316420]
  %v174 = vld.sshfl [vmem:[#allocation1 + $0x8] sm:$0xff pattern:$0x75316420]
  %v175 = vld.sshfl [vmem:[#allocation1 + $0x10] sm:$0xff pattern:$0x75316420]
  %v176 = vld.sshfl [vmem:[#allocation1 + $0x18] sm:$0xff pattern:$0x75316420]
  %v177 = vld.sshfl [vmem:[#allocation1 + $0x20] sm:$0xff pattern:$0x75316420]
  %v178 = vld.sshfl [vmem:[#allocation1 + $0x28] sm:$0xff pattern:$0x75316420]
  %v179 = vld.sshfl [vmem:[#allocation1 + $0x30] sm:$0xff pattern:$0x75316420]
  %v180 = vld.sshfl [vmem:[#allocation1 + $0x38] sm:$0xff pattern:$0x75316420]
  %189 = vmatpush.msra.mxu0 %v45
  %190 = vmatpush.msra.mxu0 %v44
  %191 = vmatpush.msra.mxu0 %v43
  %192 = vmatpush.msra.mxu0 %v42
  %193 = vmatpush.msra.mxu0 %v41
  %194 = vmatpush.msra.mxu0 %v40
  %195 = vmatpush.msra.mxu0 %v39
  %196 = vmatpush.msra.mxu0 %v38
  %197 = vmatpush.msra.mxu0 %v37
  %198 = vmatpush.msra.mxu0 %v36
  %199 = vmatpush.msra.mxu0 %v35
  %200 = vmatpush.msra.mxu0 %v34
  %201 = vmatpush.msra.mxu0 %v33
  %202 = vmatpush.msra.mxu0 %v32
  %203 = vmatpush.msra.mxu0 %v31
  %204 = vmatpush.msra.mxu0 %v30
  %205 = vmatmul.f32.gmra.mxu0 %v173
  %v206 = vpop.f32.mrf.mxu0
  %v207 = vadd.f32 %v160, %v206
  %208 = vdwg.mxu0
  %209 = vmatpush.msra.mxu0 %v61
  %210 = vmatpush.msra.mxu0 %v60
  %211 = vmatpush.msra.mxu0 %v59
  %212 = vmatpush.msra.mxu0 %v58
  %213 = vmatpush.msra.mxu0 %v57
  %214 = vmatpush.msra.mxu0 %v56
  %215 = vmatpush.msra.mxu0 %v55
  %216 = vmatpush.msra.mxu0 %v54
  %217 = vmatpush.msra.mxu0 %v53
  %218 = vmatpush.msra.mxu0 %v52
  %219 = vmatpush.msra.mxu0 %v51
  %220 = vmatpush.msra.mxu0 %v50
  %221 = vmatpush.msra.mxu0 %v49
  %222 = vmatpush.msra.mxu0 %v48
  %223 = vmatpush.msra.mxu0 %v47
  %224 = vmatpush.msra.mxu0 %v46
  %225 = vmatmul.f32.gmra.mxu0 %v174
  %v226 = vpop.f32.mrf.mxu0
  %v227 = vadd.f32 %v207, %v226
  %228 = vdwg.mxu0
  %229 = vmatpush.msra.mxu0 %v77
  %230 = vmatpush.msra.mxu0 %v76
  %231 = vmatpush.msra.mxu0 %v75
  %232 = vmatpush.msra.mxu0 %v74
  %233 = vmatpush.msra.mxu0 %v73
  %234 = vmatpush.msra.mxu0 %v72
  %235 = vmatpush.msra.mxu0 %v71
  %236 = vmatpush.msra.mxu0 %v70
  %237 = vmatpush.msra.mxu0 %v69
  %238 = vmatpush.msra.mxu0 %v68
  %239 = vmatpush.msra.mxu0 %v67
  %240 = vmatpush.msra.mxu0 %v66
  %241 = vmatpush.msra.mxu0 %v65
  %242 = vmatpush.msra.mxu0 %v64
  %243 = vmatpush.msra.mxu0 %v63
  %244 = vmatpush.msra.mxu0 %v62
  %245 = vmatmul.f32.gmra.mxu0 %v175
  %v246 = vpop.f32.mrf.mxu0
  %v247 = vadd.f32 %v227, %v246
  %248 = vdwg.mxu0
  %249 = vmatpush.msra.mxu0 %v93
  %250 = vmatpush.msra.mxu0 %v92
  %251 = vmatpush.msra.mxu0 %v91
  %252 = vmatpush.msra.mxu0 %v90
  %253 = vmatpush.msra.mxu0 %v89
  %254 = vmatpush.msra.mxu0 %v88
  %255 = vmatpush.msra.mxu0 %v87
  %256 = vmatpush.msra.mxu0 %v86
  %257 = vmatpush.msra.mxu0 %v85
  %258 = vmatpush.msra.mxu0 %v84
  %259 = vmatpush.msra.mxu0 %v83
  %260 = vmatpush.msra.mxu0 %v82
  %261 = vmatpush.msra.mxu0 %v81
  %262 = vmatpush.msra.mxu0 %v80
  %263 = vmatpush.msra.mxu0 %v79
  %264 = vmatpush.msra.mxu0 %v78
  %265 = vmatmul.f32.gmra.mxu0 %v176
  %v266 = vpop.f32.mrf.mxu0
  %v267 = vadd.f32 %v247, %v266
  %268 = vdwg.mxu0
  %269 = vmatpush.msra.mxu0 %v109
  %270 = vmatpush.msra.mxu0 %v108
  %271 = vmatpush.msra.mxu0 %v107
  %272 = vmatpush.msra.mxu0 %v106
  %273 = vmatpush.msra.mxu0 %v105
  %274 = vmatpush.msra.mxu0 %v104
  %275 = vmatpush.msra.mxu0 %v103
  %276 = vmatpush.msra.mxu0 %v102
  %277 = vmatpush.msra.mxu0 %v101
  %278 = vmatpush.msra.mxu0 %v100
  %279 = vmatpush.msra.mxu0 %v99
  %280 = vmatpush.msra.mxu0 %v98
  %281 = vmatpush.msra.mxu0 %v97
  %282 = vmatpush.msra.mxu0 %v96
  %283 = vmatpush.msra.mxu0 %v95
  %284 = vmatpush.msra.mxu0 %v94
  %285 = vmatmul.f32.gmra.mxu0 %v177
  %v286 = vpop.f32.mrf.mxu0
  %v287 = vadd.f32 %v267, %v286
  %288 = vdwg.mxu0
  %289 = vmatpush.msra.mxu0 %v125
  %290 = vmatpush.msra.mxu0 %v124
  %291 = vmatpush.msra.mxu0 %v123
  %292 = vmatpush.msra.mxu0 %v122
  %293 = vmatpush.msra.mxu0 %v121
  %294 = vmatpush.msra.mxu0 %v120
  %295 = vmatpush.msra.mxu0 %v119
  %296 = vmatpush.msra.mxu0 %v118
  %297 = vmatpush.msra.mxu0 %v117
  %298 = vmatpush.msra.mxu0 %v116
  %299 = vmatpush.msra.mxu0 %v115
  %300 = vmatpush.msra.mxu0 %v114
  %301 = vmatpush.msra.mxu0 %v113
  %302 = vmatpush.msra.mxu0 %v112
  %303 = vmatpush.msra.mxu0 %v111
  %304 = vmatpush.msra.mxu0 %v110
  %305 = vmatmul.f32.gmra.mxu0 %v178
  %v306 = vpop.f32.mrf.mxu0
  %v307 = vadd.f32 %v287, %v306
  %308 = vdwg.mxu0
  %309 = vmatpush.msra.mxu0 %v141
  %310 = vmatpush.msra.mxu0 %v140
  %311 = vmatpush.msra.mxu0 %v139
  %312 = vmatpush.msra.mxu0 %v138
  %313 = vmatpush.msra.mxu0 %v137
  %314 = vmatpush.msra.mxu0 %v136
  %315 = vmatpush.msra.mxu0 %v135
  %316 = vmatpush.msra.mxu0 %v134
  %317 = vmatpush.msra.mxu0 %v133
  %318 = vmatpush.msra.mxu0 %v132
  %319 = vmatpush.msra.mxu0 %v131
  %320 = vmatpush.msra.mxu0 %v130
  %321 = vmatpush.msra.mxu0 %v129
  %322 = vmatpush.msra.mxu0 %v128
  %323 = vmatpush.msra.mxu0 %v127
  %324 = vmatpush.msra.mxu0 %v126
  %325 = vmatmul.f32.gmra.mxu0 %v179
  %v326 = vpop.f32.mrf.mxu0
  %v327 = vadd.f32 %v307, %v326
  %328 = vdwg.mxu0
  %329 = vmatpush.msra.mxu0 %v157
  %330 = vmatpush.msra.mxu0 %v156
  %331 = vmatpush.msra.mxu0 %v155
  %332 = vmatpush.msra.mxu0 %v154
  %333 = vmatpush.msra.mxu0 %v153
  %334 = vmatpush.msra.mxu0 %v152
  %335 = vmatpush.msra.mxu0 %v151
  %336 = vmatpush.msra.mxu0 %v150
  %337 = vmatpush.msra.mxu0 %v149
  %338 = vmatpush.msra.mxu0 %v148
  %339 = vmatpush.msra.mxu0 %v147
  %340 = vmatpush.msra.mxu0 %v146
  %341 = vmatpush.msra.mxu0 %v145
  %342 = vmatpush.msra.mxu0 %v144
  %343 = vmatpush.msra.mxu0 %v143
  %344 = vmatpush.msra.mxu0 %v142
  %345 = vmatmul.f32.gmra.mxu0 %v180
  %v346 = vpop.f32.mrf.mxu0
  %v347 = vadd.f32 %v327, %v346
  %348 = vdwg.mxu0
  %v349 = vmax.f32 %v347, 0.0
  %v350 = vld [vmem:[%s3] sm:$0xff]
  %v351 = vld [vmem:[%s3 + $0x8] sm:$0xff]
  %v352 = vld [vmem:[%s3 + $0x10] sm:$0xff]
  %v353 = vld [vmem:[%s3 + $0x18] sm:$0xff]
  %v354 = vld [vmem:[%s4] sm:$0x1]
  %v356 = vperm.slane %v354, 0
  %vm358 = vcmask 261120
  %v360 = vsel %vm358, %v349, 0
  %362 = vmatpush.msra.mxu0 0.0
  %363 = vmatpush.msra.mxu0 0.0
  %364 = vmatpush.msra.mxu0 0.0
  %365 = vmatpush.msra.mxu0 0.0
  %366 = vmatpush.msra.mxu0 0.0
  %367 = vmatpush.msra.mxu0 0.0
  %368 = vmatpush.msra.mxu0 0.0
  %369 = vmatpush.msra.mxu0 0.0
  %370 = vmatpush.msra.mxu0 0.0
  %371 = vmatpush.msra.mxu0 0.0
  %372 = vmatpush.msra.mxu0 0.0
  %373 = vmatpush.msra.mxu0 0.0
  %374 = vmatpush.msra.mxu0 %v353
  %375 = vmatpush.msra.mxu0 %v352
  %376 = vmatpush.msra.mxu0 %v351
  %377 = vmatpush.msra.mxu0 %v350
  %378 = vmatmul.f32.gmra.mxu0 %v360
  %v379 = vpop.f32.mrf.mxu0
  %v380 = vadd.f32 %v356, %v379
  %381 = vdwg.mxu0
  %v382 = vmax.f32 %v380, 0.0
  %v383 = vld [vmem:[%s5] sm:$0xff]
  %v384 = vld [vmem:[%s5 + $0x8] sm:$0xff]
  %v385 = vld [vmem:[%s5 + $0x10] sm:$0xff]
  %v386 = vld [vmem:[%s5 + $0x18] sm:$0xff]
  %v387 = vld [vmem:[%s6] sm:$0x1]
  %v389 = vperm.slane %v387, 0
  %v392 = vsel %vm358, %v382, 0
  %394 = vmatpush.msra.mxu0 0.0
  %395 = vmatpush.msra.mxu0 0.0
  %396 = vmatpush.msra.mxu0 0.0
  %397 = vmatpush.msra.mxu0 0.0
  %398 = vmatpush.msra.mxu0 0.0
  %399 = vmatpush.msra.mxu0 0.0
  %400 = vmatpush.msra.mxu0 0.0
  %401 = vmatpush.msra.mxu0 0.0
  %402 = vmatpush.msra.mxu0 0.0
  %403 = vmatpush.msra.mxu0 0.0
  %404 = vmatpush.msra.mxu0 0.0
  %405 = vmatpush.msra.mxu0 0.0
  %406 = vmatpush.msra.mxu0 %v386
  %407 = vmatpush.msra.mxu0 %v385
  %408 = vmatpush.msra.mxu0 %v384
  %409 = vmatpush.msra.mxu0 %v383
  %410 = vmatmul.f32.gmra.mxu0 %v392
  %v411 = vpop.f32.mrf.mxu0
  %v412 = vadd.f32 %v389, %v411
  %413 = vdwg.mxu0
  %v414 = vmax.f32 %v412, 0.0
  %415 = vst [vmem:[%s7] sm:$0xf] %v414
  // Predicated region
  $region30: #{gnn_forward.7} parent=0 // pred_check
    _
  $region31: #{gnn_forward.7} parent=0 // pred_check_branch
    %417 = sbr.rel (0) target = $region33
  $region32: #{gnn_forward.7} parent=0 // pred_region
    _
  $region33: #{gnn_forward.7} parent=0 // pred_fallthru
    _
  // Predicated region
  $region34: #{gnn_forward.7} parent=0 // pred_check
    _
  $region35: #{gnn_forward.7} parent=0 // pred_check_branch
    %419 = sbr.rel (0) target = $region37
  $region36: #{gnn_forward.7} parent=0 // pred_region
    _
  $region37: #{gnn_forward.7} parent=0 // pred_fallthru
    _

</llo_original>
